<compile_context>
chip_gen: v7x
topology: tpu7x:2x2x1
jax: 0.10.0
libtpu: 0.0.40
codegen_flags: <defaults>
</compile_context>

<pallas_src>
import functools
import math

import jax
import jax.numpy as jnp
import numpy as np
from jax.experimental import pallas as pl
from jax.experimental.pallas import tpu as pltpu


def _pick_tc(T):
    """Time-chunk size: amortize per-grid-step overhead, cap padding waste."""
    if T > 16:
        return 32
    if T > 8:
        return 16
    return 8


# --------------------------- fused Pallas kernel ----------------------------

def _lstm_ln_kernel(xg_ref, whh_ref, lens_ref, gamma_ref, beta_ref, out_ref,
                    h_scr, c_scr, *, tc, hd, eps):
    """One grid step = `tc` LSTM timesteps for one batch block, each followed
    by the fused pad_packed_sequence zeroing + LayerNorm epilogue.

    Gate layout is packed (PyTorch order i|f|g|o) over 4*hd lanes; for the
    target hd=32 that is exactly one 128-lane vreg, so sigmoid and tanh are
    each evaluated once per step over the whole packed vreg.
    """
    t_blk = pl.program_id(1)

    @pl.when(t_blk == 0)
    def _():
        h_scr[...] = jnp.zeros_like(h_scr)
        c_scr[...] = jnp.zeros_like(c_scr)

    w = whh_ref[...]                       # (hd, 4*hd), resident
    gamma = gamma_ref[...]                 # (1, hd)
    beta = beta_ref[...]                   # (1, hd)
    lens = lens_ref[...]                   # (Bb, 1) int32
    t0 = t_blk * tc
    inv_d = 1.0 / hd

    # Carry h/c in vregs across the unrolled chunk; write scratch once at end.
    h = h_scr[...]                         # (Bb, hd)
    c = c_scr[...]
    for t in range(tc):                    # static -> fully unrolled
        gates = xg_ref[t] + jnp.dot(h, w, preferred_element_type=jnp.float32)
        sig = jax.nn.sigmoid(gates)        # one EUP pass over the packed gates
        th = jnp.tanh(gates)               # one EUP pass over the packed gates
        i = sig[:, 0 * hd:1 * hd]
        f = sig[:, 1 * hd:2 * hd]
        g = th[:, 2 * hd:3 * hd]
        o = sig[:, 3 * hd:4 * hd]
        c = f * c + i * g
        h = o * jnp.tanh(c)

        # Fused epilogue: zero padded rows (pad_packed_sequence) + LayerNorm.
        valid = ((t0 + t) < lens).astype(jnp.float32)    # (Bb, 1)
        x = h * valid
        mean = jnp.sum(x, axis=-1, keepdims=True) * inv_d
        xc = x - mean
        var = jnp.sum(xc * xc, axis=-1, keepdims=True) * inv_d
        out_ref[t] = xc * jax.lax.rsqrt(var + eps) * gamma + beta

    h_scr[...] = h
    c_scr[...] = c


def lstm_layernorm(xg, whh_t, lens_col, gamma, beta, *, tc, bb, hd, eps=1e-5):
    """xg: (Tp, Bp, 4*hd) pre-projected gate inputs; whh_t: (hd, 4*hd);
    lens_col: (Bp, 1) int32; gamma/beta: (1, hd).  Returns (Tp, Bp, hd)."""
    Tp, Bp, _ = xg.shape
    return pl.pallas_call(
        functools.partial(_lstm_ln_kernel, tc=tc, hd=hd, eps=eps),
        out_shape=jax.ShapeDtypeStruct((Tp, Bp, hd), jnp.float32),
        grid=(Bp // bb, Tp // tc),
        in_specs=[pl.BlockSpec((tc, bb, 4 * hd), lambda b, t: (t, b, 0)),
                  pl.BlockSpec((hd, 4 * hd), lambda b, t: (0, 0)),
                  pl.BlockSpec((bb, 1), lambda b, t: (b, 0)),
                  pl.BlockSpec((1, hd), lambda b, t: (0, 0)),
                  pl.BlockSpec((1, hd), lambda b, t: (0, 0))],
        out_specs=pl.BlockSpec((tc, bb, hd), lambda b, t: (t, b, 0)),
        scratch_shapes=[pltpu.VMEM((bb, hd), jnp.float32),
                        pltpu.VMEM((bb, hd), jnp.float32)],
        compiler_params=pltpu.CompilerParams(
            dimension_semantics=("parallel", "arbitrary")),
    )(xg.astype(jnp.float32), whh_t.astype(jnp.float32),
      lens_col.astype(jnp.int32),
      gamma.astype(jnp.float32), beta.astype(jnp.float32))


# ----------------------------- Reader forward ------------------------------

def reader_forward(params, input_x, *, embed_dim):
    """Matches PyTorch Reader.forward: returns (output (T,B,2*ed), mask (B,T))."""
    H = 2 * embed_dim
    lens = [int(x.shape[0]) for x in input_x]
    B, T = len(input_x), max(lens)
    tc = _pick_tc(T)
    Tp = ((T + tc - 1) // tc) * tc           # time padded to a multiple of tc
    Bp = ((B + 7) // 8) * 8                  # batch padded to sublane width
    if Bp > 128:                             # larger batches: 128-row blocks
        Bp = ((Bp + 127) // 128) * 128
        bb = 128
    else:
        bb = Bp

    # Host-side ids / lens packing: one H2D copy instead of B tiny
    # dynamic-update-slice XLA ops.  Padded positions use token 0; the LSTM is
    # causal so they never affect valid prefix outputs, and their rows are
    # zeroed in-kernel before LayerNorm (mirroring pad_packed_sequence + LN).
    ids_np = np.zeros((Tp, Bp), np.int32)
    for b, x in enumerate(input_x):
        ids_np[:lens[b], b] = np.asarray(x, dtype=np.int32)
    ids = jnp.asarray(ids_np)
    lens_col = jnp.asarray(
        np.array(lens + [0] * (Bp - B), np.int32).reshape(Bp, 1))

    # Algebraic fold of embedding + input projection: the gate pre-activation
    # for token v is a row of proj_table = E @ W_ih^T + (b_ih + b_hh), so the
    # per-(t,b) gate inputs are a pure gather.  (Table is (vocab, 4H); for
    # large vocabularies fall back to a gathered-embedding matmul instead.)
    w_ih = params['w_ih'].astype(jnp.float32)            # (4H, D)
    w_hh = params['w_hh'].astype(jnp.float32)            # (4H, H)
    bias = (params['b_ih'] + params['b_hh']).astype(jnp.float32)
    proj_table = params['embedding'].astype(jnp.float32) @ w_ih.T + bias
    xg = jnp.take(proj_table, ids, axis=0)               # (Tp, Bp, 4H)
    whh_t = w_hh.T                                       # (H, 4H), packed i|f|g|o

    out = lstm_layernorm(xg, whh_t, lens_col,
                         params['gamma'].reshape(1, H),
                         params['beta'].reshape(1, H),
                         tc=tc, bb=bb, hd=H)             # (Tp, Bp, H)
    output = out[:T, :B, :]                              # (T, B, 2*ed)

    # get_mask: 0.0 at valid positions, 1.0 at padding.
    mask = (jnp.arange(T)[None, :] >= jnp.asarray(lens)[:, None]
            ).astype(jnp.float32)                        # (B, T)
    return output, mask


# ----------------------------- pure-JAX reference ---------------------------

def _ref_lstm(x, w_ih, w_hh, b_ih, b_hh):
    H = w_hh.shape[1]

    def step(carry, xt):
        h, c = carry
        gates = xt @ w_ih.T + b_ih + h @ w_hh.T + b_hh
        i = jax.nn.sigmoid(gates[0:H])
        f = jax.nn.sigmoid(gates[H:2 * H])
        g = jnp.tanh(gates[2 * H:3 * H])
        o = jax.nn.sigmoid(gates[3 * H:4 * H])
        c = f * c + i * g
        h = o * jnp.tanh(c)
        return (h, c), h

    init = (jnp.zeros((H,), jnp.float32), jnp.zeros((H,), jnp.float32))
    _, hs = jax.lax.scan(step, init, x)
    return hs


def reference_reader(params, input_x, eps=1e-5):
    lens = [int(x.shape[0]) for x in input_x]
    T = max(lens)
    cols = []
    for x in input_x:
        e = jnp.take(params['embedding'], x.astype(jnp.int32), axis=0)
        hs = _ref_lstm(e, params['w_ih'], params['w_hh'],
                       params['b_ih'], params['b_hh'])
        cols.append(jnp.pad(hs, ((0, T - hs.shape[0]), (0, 0))))
    padded = jnp.stack(cols, axis=1)                     # (T, B, H)
    mean = jnp.mean(padded, -1, keepdims=True)
    var = jnp.mean(jnp.square(padded - mean), -1, keepdims=True)
    out = (padded - mean) / jnp.sqrt(var + eps) * params['gamma'] + params['beta']
    mask = (jnp.arange(T)[None, :] >= jnp.asarray(lens)[:, None]).astype(jnp.float32)
    return out, mask


# ----------------------------- params & main --------------------------------

def init_reader_params(key, embed_dim, vocab_size):
    H = 2 * embed_dim
    k = jax.random.split(key, 5)
    s = 1.0 / math.sqrt(H)
    return dict(
        embedding=jax.random.normal(k[0], (vocab_size, embed_dim), jnp.float32),
        w_ih=jax.random.uniform(k[1], (4 * H, embed_dim), jnp.float32, -s, s),
        w_hh=jax.random.uniform(k[2], (4 * H, H), jnp.float32, -s, s),
        b_ih=jax.random.uniform(k[3], (4 * H,), jnp.float32, -s, s),
        b_hh=jax.random.uniform(k[4], (4 * H,), jnp.float32, -s, s),
        gamma=jnp.ones((H,), jnp.float32),
        beta=jnp.zeros((H,), jnp.float32),
    )


if __name__ == "__main__":
    embed_dim, vocab_size = 16, 20
    key = jax.random.PRNGKey(0)
    pkey, tk1, tk2 = jax.random.split(key, 3)
    params = init_reader_params(pkey, embed_dim, vocab_size)

    # Two variable-length token sequences (the Reader's `input_x`).
    input_x = [jax.random.randint(tk1, (6,), 0, vocab_size),
               jax.random.randint(tk2, (4,), 0, vocab_size)]

    output, mask = reader_forward(params, input_x, embed_dim=embed_dim)
    jax.block_until_ready((output, mask))

    assert output.shape == (6, 2, 2 * embed_dim)
    assert mask.shape == (2, 6)

    ref_out, ref_mask = reference_reader(params, input_x)
    np.testing.assert_allclose(np.asarray(output), np.asarray(ref_out),
                               rtol=1e-4, atol=1e-3)
    np.testing.assert_allclose(np.asarray(mask), np.asarray(ref_mask))

    print("KERNEL_OK")
</pallas_src>

<mosaic_0001>
module attributes {stable_mosaic.version = 11 : i64} {
  func.func @_lstm_ln_kernel(%arg0: i32, %arg1: i32, %arg2: memref<8x8x128xf32, #tpu.memory_space<vmem>>, %arg3: memref<32x128xf32, #tpu.memory_space<vmem>>, %arg4: memref<8x1xi32, #tpu.memory_space<vmem>>, %arg5: memref<1x32xf32, #tpu.memory_space<vmem>>, %arg6: memref<1x32xf32, #tpu.memory_space<vmem>>, %arg7: memref<8x8x32xf32, #tpu.memory_space<vmem>>, %arg8: memref<8x32xf32, #tpu.memory_space<vmem>>, %arg9: memref<8x32xf32, #tpu.memory_space<vmem>>) attributes {dimension_semantics = [#tpu.dimension_semantics<parallel>, #tpu.dimension_semantics<arbitrary>], iteration_bounds = array<i64: 1, 1>, scalar_prefetch = 0 : i64, scratch_operands = 2 : i64, tpu.core_type = #tpu.core_type<tc>, window_params = [{transform_indices = @transform_0, window_bounds = array<i64: 8, 8, 128>}, {pipeline_mode = #tpu.pipeline_mode<synchronous>, transform_indices = @transform_1, window_bounds = array<i64: 32, 128>}, {transform_indices = @transform_2, window_bounds = array<i64: 8, 1>}, {pipeline_mode = #tpu.pipeline_mode<synchronous>, transform_indices = @transform_3, window_bounds = array<i64: 1, 32>}, {pipeline_mode = #tpu.pipeline_mode<synchronous>, transform_indices = @transform_4, window_bounds = array<i64: 1, 32>}, {transform_indices = @transform_5, window_bounds = array<i64: 8, 8, 32>}]} {
    %c0_i32 = arith.constant 0 : i32
    %0 = arith.cmpi eq, %arg1, %c0_i32 : i32
    %1 = arith.extui %0 : i1 to i32
    %c0_i32_0 = arith.constant 0 : i32
    %2 = arith.cmpi ne, %1, %c0_i32_0 : i32
    scf.if %2 {
      %cst_113 = arith.constant 0.000000e+00 : f32
      %404 = vector.broadcast %cst_113 : f32 to vector<8x32xf32>
      %c0_114 = arith.constant 0 : index
      %c0_115 = arith.constant 0 : index
      %405 = vector.load %arg8[%c0_114, %c0_115] : memref<8x32xf32, #tpu.memory_space<vmem>>, vector<8x32xf32>
      tpu.vector_store %arg8[%c0_114, %c0_115], %404 {strides = array<i32>} : memref<8x32xf32, #tpu.memory_space<vmem>>, vector<8x32xf32>,
      %cst_116 = arith.constant 0.000000e+00 : f32
      %406 = vector.broadcast %cst_116 : f32 to vector<8x32xf32>
      %c0_117 = arith.constant 0 : index
      %c0_118 = arith.constant 0 : index
      %407 = vector.load %arg9[%c0_117, %c0_118] : memref<8x32xf32, #tpu.memory_space<vmem>>, vector<8x32xf32>
      tpu.vector_store %arg9[%c0_117, %c0_118], %406 {strides = array<i32>} : memref<8x32xf32, #tpu.memory_space<vmem>>, vector<8x32xf32>,
    } else {
    }
    %c0 = arith.constant 0 : index
    %c0_1 = arith.constant 0 : index
    %3 = vector.load %arg3[%c0, %c0_1] : memref<32x128xf32, #tpu.memory_space<vmem>>, vector<32x128xf32>
    %c0_2 = arith.constant 0 : index
    %c0_3 = arith.constant 0 : index
    %4 = vector.load %arg5[%c0_2, %c0_3] : memref<1x32xf32, #tpu.memory_space<vmem>>, vector<1x32xf32>
    %c0_4 = arith.constant 0 : index
    %c0_5 = arith.constant 0 : index
    %5 = vector.load %arg6[%c0_4, %c0_5] : memref<1x32xf32, #tpu.memory_space<vmem>>, vector<1x32xf32>
    %c0_6 = arith.constant 0 : index
    %c0_7 = arith.constant 0 : index
    %6 = vector.load %arg4[%c0_6, %c0_7] : memref<8x1xi32, #tpu.memory_space<vmem>>, vector<8x1xi32>
    %c8_i32 = arith.constant 8 : i32
    %7 = arith.muli %arg1, %c8_i32 : i32
    %c0_8 = arith.constant 0 : index
    %c0_9 = arith.constant 0 : index
    %8 = vector.load %arg8[%c0_8, %c0_9] : memref<8x32xf32, #tpu.memory_space<vmem>>, vector<8x32xf32>
    %c0_10 = arith.constant 0 : index
    %c0_11 = arith.constant 0 : index
    %9 = vector.load %arg9[%c0_10, %c0_11] : memref<8x32xf32, #tpu.memory_space<vmem>>, vector<8x32xf32>
    %c0_12 = arith.constant 0 : index
    %c0_13 = arith.constant 0 : index
    %c0_14 = arith.constant 0 : index
    %10 = vector.load %arg2[%c0_12, %c0_13, %c0_14] : memref<8x8x128xf32, #tpu.memory_space<vmem>>, vector<1x8x128xf32>
    %11 = vector.shape_cast %10 : vector<1x8x128xf32> to vector<8x128xf32>
    %cst = arith.constant dense<0.000000e+00> : vector<8x128xf32>
    %12 = tpu.matmul %8, %3, %cst {dimension_numbers = #tpu.dot_dimension_numbers<[1], [0], [0], [1], [0, 0, 1, 1], [], []>} : vector<8x32xf32>, vector<32x128xf32>, vector<8x128xf32> -> vector<8x128xf32>
    %13 = arith.addf %11, %12 : vector<8x128xf32>
    %14 = arith.negf %13 : vector<8x128xf32>
    %15 = math.exp %14 : vector<8x128xf32>
    %cst_15 = arith.constant 1.000000e+00 : f32
    %16 = vector.broadcast %cst_15 : f32 to vector<8x128xf32>
    %17 = arith.addf %16, %15 : vector<8x128xf32>
    %18 = arith.divf %16, %17 : vector<8x128xf32>
    %19 = math.tanh %13 : vector<8x128xf32>
    %20 = vector.extract_strided_slice %18 {offsets = [0, 0], sizes = [8, 32], strides = [1, 1]} : vector<8x128xf32> to vector<8x32xf32>
    %21 = vector.extract_strided_slice %18 {offsets = [0, 32], sizes = [8, 32], strides = [1, 1]} : vector<8x128xf32> to vector<8x32xf32>
    %22 = vector.extract_strided_slice %19 {offsets = [0, 64], sizes = [8, 32], strides = [1, 1]} : vector<8x128xf32> to vector<8x32xf32>
    %23 = vector.extract_strided_slice %18 {offsets = [0, 96], sizes = [8, 32], strides = [1, 1]} : vector<8x128xf32> to vector<8x32xf32>
    %24 = arith.mulf %21, %9 : vector<8x32xf32>
    %25 = arith.mulf %20, %22 : vector<8x32xf32>
    %26 = arith.addf %24, %25 : vector<8x32xf32>
    %27 = math.tanh %26 : vector<8x32xf32>
    %28 = arith.mulf %23, %27 : vector<8x32xf32>
    %c0_i32_16 = arith.constant 0 : i32
    %29 = arith.addi %7, %c0_i32_16 : i32
    %30 = vector.broadcast %29 : i32 to vector<8x1xi32>
    %31 = arith.cmpi slt, %30, %6 : vector<8x1xi32>
    %32 = arith.extui %31 : vector<8x1xi1> to vector<8x1xi32>
    %33 = arith.sitofp %32 : vector<8x1xi32> to vector<8x1xf32>
    %34 = vector.broadcast %33 : vector<8x1xf32> to vector<8x32xf32>
    %35 = arith.mulf %28, %34 : vector<8x32xf32>
    %cst_17 = arith.constant dense<0.000000e+00> : vector<8xf32>
    %36 = vector.multi_reduction <add>, %35, %cst_17 [1] : vector<8x32xf32> to vector<8xf32>
    %37 = vector.shape_cast %36 : vector<8xf32> to vector<8x1xf32>
    %cst_18 = arith.constant 3.125000e-02 : f32
    %38 = vector.broadcast %cst_18 : f32 to vector<8x1xf32>
    %39 = arith.mulf %37, %38 : vector<8x1xf32>
    %40 = vector.broadcast %39 : vector<8x1xf32> to vector<8x32xf32>
    %41 = arith.subf %35, %40 : vector<8x32xf32>
    %42 = arith.mulf %41, %41 : vector<8x32xf32>
    %cst_19 = arith.constant dense<0.000000e+00> : vector<8xf32>
    %43 = vector.multi_reduction <add>, %42, %cst_19 [1] : vector<8x32xf32> to vector<8xf32>
    %44 = vector.shape_cast %43 : vector<8xf32> to vector<8x1xf32>
    %cst_20 = arith.constant 3.125000e-02 : f32
    %45 = vector.broadcast %cst_20 : f32 to vector<8x1xf32>
    %46 = arith.mulf %44, %45 : vector<8x1xf32>
    %cst_21 = arith.constant 9.99999974E-6 : f32
    %47 = vector.broadcast %cst_21 : f32 to vector<8x1xf32>
    %48 = arith.addf %46, %47 : vector<8x1xf32>
    %49 = math.rsqrt %48 : vector<8x1xf32>
    %50 = vector.broadcast %49 : vector<8x1xf32> to vector<8x32xf32>
    %51 = arith.mulf %41, %50 : vector<8x32xf32>
    %52 = vector.broadcast %4 : vector<1x32xf32> to vector<8x32xf32>
    %53 = arith.mulf %51, %52 : vector<8x32xf32>
    %54 = vector.broadcast %5 : vector<1x32xf32> to vector<8x32xf32>
    %55 = arith.addf %53, %54 : vector<8x32xf32>
    %c0_22 = arith.constant 0 : index
    %c0_23 = arith.constant 0 : index
    %c0_24 = arith.constant 0 : index
    %56 = vector.load %arg7[%c0_22, %c0_23, %c0_24] : memref<8x8x32xf32, #tpu.memory_space<vmem>>, vector<1x8x32xf32>
    %57 = vector.shape_cast %56 : vector<1x8x32xf32> to vector<8x32xf32>
    %58 = vector.shape_cast %55 : vector<8x32xf32> to vector<1x8x32xf32>
    tpu.vector_store %arg7[%c0_22, %c0_23, %c0_24], %58 {strides = array<i32>} : memref<8x8x32xf32, #tpu.memory_space<vmem>>, vector<1x8x32xf32>,
    %c1 = arith.constant 1 : index
    %c0_25 = arith.constant 0 : index
    %c0_26 = arith.constant 0 : index
    %59 = vector.load %arg2[%c1, %c0_25, %c0_26] : memref<8x8x128xf32, #tpu.memory_space<vmem>>, vector<1x8x128xf32>
    %60 = vector.shape_cast %59 : vector<1x8x128xf32> to vector<8x128xf32>
    %cst_27 = arith.constant dense<0.000000e+00> : vector<8x128xf32>
    %61 = tpu.matmul %28, %3, %cst_27 {dimension_numbers = #tpu.dot_dimension_numbers<[1], [0], [0], [1], [0, 0, 1, 1], [], []>} : vector<8x32xf32>, vector<32x128xf32>, vector<8x128xf32> -> vector<8x128xf32>
    %62 = arith.addf %60, %61 : vector<8x128xf32>
    %63 = arith.negf %62 : vector<8x128xf32>
    %64 = math.exp %63 : vector<8x128xf32>
    %cst_28 = arith.constant 1.000000e+00 : f32
    %65 = vector.broadcast %cst_28 : f32 to vector<8x128xf32>
    %66 = arith.addf %65, %64 : vector<8x128xf32>
    %67 = arith.divf %65, %66 : vector<8x128xf32>
    %68 = math.tanh %62 : vector<8x128xf32>
    %69 = vector.extract_strided_slice %67 {offsets = [0, 0], sizes = [8, 32], strides = [1, 1]} : vector<8x128xf32> to vector<8x32xf32>
    %70 = vector.extract_strided_slice %67 {offsets = [0, 32], sizes = [8, 32], strides = [1, 1]} : vector<8x128xf32> to vector<8x32xf32>
    %71 = vector.extract_strided_slice %68 {offsets = [0, 64], sizes = [8, 32], strides = [1, 1]} : vector<8x128xf32> to vector<8x32xf32>
    %72 = vector.extract_strided_slice %67 {offsets = [0, 96], sizes = [8, 32], strides = [1, 1]} : vector<8x128xf32> to vector<8x32xf32>
    %73 = arith.mulf %70, %26 : vector<8x32xf32>
    %74 = arith.mulf %69, %71 : vector<8x32xf32>
    %75 = arith.addf %73, %74 : vector<8x32xf32>
    %76 = math.tanh %75 : vector<8x32xf32>
    %77 = arith.mulf %72, %76 : vector<8x32xf32>
    %c1_i32 = arith.constant 1 : i32
    %78 = arith.addi %7, %c1_i32 : i32
    %79 = vector.broadcast %78 : i32 to vector<8x1xi32>
    %80 = arith.cmpi slt, %79, %6 : vector<8x1xi32>
    %81 = arith.extui %80 : vector<8x1xi1> to vector<8x1xi32>
    %82 = arith.sitofp %81 : vector<8x1xi32> to vector<8x1xf32>
    %83 = vector.broadcast %82 : vector<8x1xf32> to vector<8x32xf32>
    %84 = arith.mulf %77, %83 : vector<8x32xf32>
    %cst_29 = arith.constant dense<0.000000e+00> : vector<8xf32>
    %85 = vector.multi_reduction <add>, %84, %cst_29 [1] : vector<8x32xf32> to vector<8xf32>
    %86 = vector.shape_cast %85 : vector<8xf32> to vector<8x1xf32>
    %cst_30 = arith.constant 3.125000e-02 : f32
    %87 = vector.broadcast %cst_30 : f32 to vector<8x1xf32>
    %88 = arith.mulf %86, %87 : vector<8x1xf32>
    %89 = vector.broadcast %88 : vector<8x1xf32> to vector<8x32xf32>
    %90 = arith.subf %84, %89 : vector<8x32xf32>
    %91 = arith.mulf %90, %90 : vector<8x32xf32>
    %cst_31 = arith.constant dense<0.000000e+00> : vector<8xf32>
    %92 = vector.multi_reduction <add>, %91, %cst_31 [1] : vector<8x32xf32> to vector<8xf32>
    %93 = vector.shape_cast %92 : vector<8xf32> to vector<8x1xf32>
    %cst_32 = arith.constant 3.125000e-02 : f32
    %94 = vector.broadcast %cst_32 : f32 to vector<8x1xf32>
    %95 = arith.mulf %93, %94 : vector<8x1xf32>
    %cst_33 = arith.constant 9.99999974E-6 : f32
    %96 = vector.broadcast %cst_33 : f32 to vector<8x1xf32>
    %97 = arith.addf %95, %96 : vector<8x1xf32>
    %98 = math.rsqrt %97 : vector<8x1xf32>
    %99 = vector.broadcast %98 : vector<8x1xf32> to vector<8x32xf32>
    %100 = arith.mulf %90, %99 : vector<8x32xf32>
    %101 = vector.broadcast %4 : vector<1x32xf32> to vector<8x32xf32>
    %102 = arith.mulf %100, %101 : vector<8x32xf32>
    %103 = vector.broadcast %5 : vector<1x32xf32> to vector<8x32xf32>
    %104 = arith.addf %102, %103 : vector<8x32xf32>
    %c1_34 = arith.constant 1 : index
    %c0_35 = arith.constant 0 : index
    %c0_36 = arith.constant 0 : index
    %105 = vector.load %arg7[%c1_34, %c0_35, %c0_36] : memref<8x8x32xf32, #tpu.memory_space<vmem>>, vector<1x8x32xf32>
    %106 = vector.shape_cast %105 : vector<1x8x32xf32> to vector<8x32xf32>
    %107 = vector.shape_cast %104 : vector<8x32xf32> to vector<1x8x32xf32>
    tpu.vector_store %arg7[%c1_34, %c0_35, %c0_36], %107 {strides = array<i32>} : memref<8x8x32xf32, #tpu.memory_space<vmem>>, vector<1x8x32xf32>,
    %c2 = arith.constant 2 : index
    %c0_37 = arith.constant 0 : index
    %c0_38 = arith.constant 0 : index
    %108 = vector.load %arg2[%c2, %c0_37, %c0_38] : memref<8x8x128xf32, #tpu.memory_space<vmem>>, vector<1x8x128xf32>
    %109 = vector.shape_cast %108 : vector<1x8x128xf32> to vector<8x128xf32>
    %cst_39 = arith.constant dense<0.000000e+00> : vector<8x128xf32>
    %110 = tpu.matmul %77, %3, %cst_39 {dimension_numbers = #tpu.dot_dimension_numbers<[1], [0], [0], [1], [0, 0, 1, 1], [], []>} : vector<8x32xf32>, vector<32x128xf32>, vector<8x128xf32> -> vector<8x128xf32>
    %111 = arith.addf %109, %110 : vector<8x128xf32>
    %112 = arith.negf %111 : vector<8x128xf32>
    %113 = math.exp %112 : vector<8x128xf32>
    %cst_40 = arith.constant 1.000000e+00 : f32
    %114 = vector.broadcast %cst_40 : f32 to vector<8x128xf32>
    %115 = arith.addf %114, %113 : vector<8x128xf32>
    %116 = arith.divf %114, %115 : vector<8x128xf32>
    %117 = math.tanh %111 : vector<8x128xf32>
    %118 = vector.extract_strided_slice %116 {offsets = [0, 0], sizes = [8, 32], strides = [1, 1]} : vector<8x128xf32> to vector<8x32xf32>
    %119 = vector.extract_strided_slice %116 {offsets = [0, 32], sizes = [8, 32], strides = [1, 1]} : vector<8x128xf32> to vector<8x32xf32>
    %120 = vector.extract_strided_slice %117 {offsets = [0, 64], sizes = [8, 32], strides = [1, 1]} : vector<8x128xf32> to vector<8x32xf32>
    %121 = vector.extract_strided_slice %116 {offsets = [0, 96], sizes = [8, 32], strides = [1, 1]} : vector<8x128xf32> to vector<8x32xf32>
    %122 = arith.mulf %119, %75 : vector<8x32xf32>
    %123 = arith.mulf %118, %120 : vector<8x32xf32>
    %124 = arith.addf %122, %123 : vector<8x32xf32>
    %125 = math.tanh %124 : vector<8x32xf32>
    %126 = arith.mulf %121, %125 : vector<8x32xf32>
    %c2_i32 = arith.constant 2 : i32
    %127 = arith.addi %7, %c2_i32 : i32
    %128 = vector.broadcast %127 : i32 to vector<8x1xi32>
    %129 = arith.cmpi slt, %128, %6 : vector<8x1xi32>
    %130 = arith.extui %129 : vector<8x1xi1> to vector<8x1xi32>
    %131 = arith.sitofp %130 : vector<8x1xi32> to vector<8x1xf32>
    %132 = vector.broadcast %131 : vector<8x1xf32> to vector<8x32xf32>
    %133 = arith.mulf %126, %132 : vector<8x32xf32>
    %cst_41 = arith.constant dense<0.000000e+00> : vector<8xf32>
    %134 = vector.multi_reduction <add>, %133, %cst_41 [1] : vector<8x32xf32> to vector<8xf32>
    %135 = vector.shape_cast %134 : vector<8xf32> to vector<8x1xf32>
    %cst_42 = arith.constant 3.125000e-02 : f32
    %136 = vector.broadcast %cst_42 : f32 to vector<8x1xf32>
    %137 = arith.mulf %135, %136 : vector<8x1xf32>
    %138 = vector.broadcast %137 : vector<8x1xf32> to vector<8x32xf32>
    %139 = arith.subf %133, %138 : vector<8x32xf32>
    %140 = arith.mulf %139, %139 : vector<8x32xf32>
    %cst_43 = arith.constant dense<0.000000e+00> : vector<8xf32>
    %141 = vector.multi_reduction <add>, %140, %cst_43 [1] : vector<8x32xf32> to vector<8xf32>
    %142 = vector.shape_cast %141 : vector<8xf32> to vector<8x1xf32>
    %cst_44 = arith.constant 3.125000e-02 : f32
    %143 = vector.broadcast %cst_44 : f32 to vector<8x1xf32>
    %144 = arith.mulf %142, %143 : vector<8x1xf32>
    %cst_45 = arith.constant 9.99999974E-6 : f32
    %145 = vector.broadcast %cst_45 : f32 to vector<8x1xf32>
    %146 = arith.addf %144, %145 : vector<8x1xf32>
    %147 = math.rsqrt %146 : vector<8x1xf32>
    %148 = vector.broadcast %147 : vector<8x1xf32> to vector<8x32xf32>
    %149 = arith.mulf %139, %148 : vector<8x32xf32>
    %150 = vector.broadcast %4 : vector<1x32xf32> to vector<8x32xf32>
    %151 = arith.mulf %149, %150 : vector<8x32xf32>
    %152 = vector.broadcast %5 : vector<1x32xf32> to vector<8x32xf32>
    %153 = arith.addf %151, %152 : vector<8x32xf32>
    %c2_46 = arith.constant 2 : index
    %c0_47 = arith.constant 0 : index
    %c0_48 = arith.constant 0 : index
    %154 = vector.load %arg7[%c2_46, %c0_47, %c0_48] : memref<8x8x32xf32, #tpu.memory_space<vmem>>, vector<1x8x32xf32>
    %155 = vector.shape_cast %154 : vector<1x8x32xf32> to vector<8x32xf32>
    %156 = vector.shape_cast %153 : vector<8x32xf32> to vector<1x8x32xf32>
    tpu.vector_store %arg7[%c2_46, %c0_47, %c0_48], %156 {strides = array<i32>} : memref<8x8x32xf32, #tpu.memory_space<vmem>>, vector<1x8x32xf32>,
    %c3 = arith.constant 3 : index
    %c0_49 = arith.constant 0 : index
    %c0_50 = arith.constant 0 : index
    %157 = vector.load %arg2[%c3, %c0_49, %c0_50] : memref<8x8x128xf32, #tpu.memory_space<vmem>>, vector<1x8x128xf32>
    %158 = vector.shape_cast %157 : vector<1x8x128xf32> to vector<8x128xf32>
    %cst_51 = arith.constant dense<0.000000e+00> : vector<8x128xf32>
    %159 = tpu.matmul %126, %3, %cst_51 {dimension_numbers = #tpu.dot_dimension_numbers<[1], [0], [0], [1], [0, 0, 1, 1], [], []>} : vector<8x32xf32>, vector<32x128xf32>, vector<8x128xf32> -> vector<8x128xf32>
    %160 = arith.addf %158, %159 : vector<8x128xf32>
    %161 = arith.negf %160 : vector<8x128xf32>
    %162 = math.exp %161 : vector<8x128xf32>
    %cst_52 = arith.constant 1.000000e+00 : f32
    %163 = vector.broadcast %cst_52 : f32 to vector<8x128xf32>
    %164 = arith.addf %163, %162 : vector<8x128xf32>
    %165 = arith.divf %163, %164 : vector<8x128xf32>
    %166 = math.tanh %160 : vector<8x128xf32>
    %167 = vector.extract_strided_slice %165 {offsets = [0, 0], sizes = [8, 32], strides = [1, 1]} : vector<8x128xf32> to vector<8x32xf32>
    %168 = vector.extract_strided_slice %165 {offsets = [0, 32], sizes = [8, 32], strides = [1, 1]} : vector<8x128xf32> to vector<8x32xf32>
    %169 = vector.extract_strided_slice %166 {offsets = [0, 64], sizes = [8, 32], strides = [1, 1]} : vector<8x128xf32> to vector<8x32xf32>
    %170 = vector.extract_strided_slice %165 {offsets = [0, 96], sizes = [8, 32], strides = [1, 1]} : vector<8x128xf32> to vector<8x32xf32>
    %171 = arith.mulf %168, %124 : vector<8x32xf32>
    %172 = arith.mulf %167, %169 : vector<8x32xf32>
    %173 = arith.addf %171, %172 : vector<8x32xf32>
    %174 = math.tanh %173 : vector<8x32xf32>
    %175 = arith.mulf %170, %174 : vector<8x32xf32>
    %c3_i32 = arith.constant 3 : i32
    %176 = arith.addi %7, %c3_i32 : i32
    %177 = vector.broadcast %176 : i32 to vector<8x1xi32>
    %178 = arith.cmpi slt, %177, %6 : vector<8x1xi32>
    %179 = arith.extui %178 : vector<8x1xi1> to vector<8x1xi32>
    %180 = arith.sitofp %179 : vector<8x1xi32> to vector<8x1xf32>
    %181 = vector.broadcast %180 : vector<8x1xf32> to vector<8x32xf32>
    %182 = arith.mulf %175, %181 : vector<8x32xf32>
    %cst_53 = arith.constant dense<0.000000e+00> : vector<8xf32>
    %183 = vector.multi_reduction <add>, %182, %cst_53 [1] : vector<8x32xf32> to vector<8xf32>
    %184 = vector.shape_cast %183 : vector<8xf32> to vector<8x1xf32>
    %cst_54 = arith.constant 3.125000e-02 : f32
    %185 = vector.broadcast %cst_54 : f32 to vector<8x1xf32>
    %186 = arith.mulf %184, %185 : vector<8x1xf32>
    %187 = vector.broadcast %186 : vector<8x1xf32> to vector<8x32xf32>
    %188 = arith.subf %182, %187 : vector<8x32xf32>
    %189 = arith.mulf %188, %188 : vector<8x32xf32>
    %cst_55 = arith.constant dense<0.000000e+00> : vector<8xf32>
    %190 = vector.multi_reduction <add>, %189, %cst_55 [1] : vector<8x32xf32> to vector<8xf32>
    %191 = vector.shape_cast %190 : vector<8xf32> to vector<8x1xf32>
    %cst_56 = arith.constant 3.125000e-02 : f32
    %192 = vector.broadcast %cst_56 : f32 to vector<8x1xf32>
    %193 = arith.mulf %191, %192 : vector<8x1xf32>
    %cst_57 = arith.constant 9.99999974E-6 : f32
    %194 = vector.broadcast %cst_57 : f32 to vector<8x1xf32>
    %195 = arith.addf %193, %194 : vector<8x1xf32>
    %196 = math.rsqrt %195 : vector<8x1xf32>
    %197 = vector.broadcast %196 : vector<8x1xf32> to vector<8x32xf32>
    %198 = arith.mulf %188, %197 : vector<8x32xf32>
    %199 = vector.broadcast %4 : vector<1x32xf32> to vector<8x32xf32>
    %200 = arith.mulf %198, %199 : vector<8x32xf32>
    %201 = vector.broadcast %5 : vector<1x32xf32> to vector<8x32xf32>
    %202 = arith.addf %200, %201 : vector<8x32xf32>
    %c3_58 = arith.constant 3 : index
    %c0_59 = arith.constant 0 : index
    %c0_60 = arith.constant 0 : index
    %203 = vector.load %arg7[%c3_58, %c0_59, %c0_60] : memref<8x8x32xf32, #tpu.memory_space<vmem>>, vector<1x8x32xf32>
    %204 = vector.shape_cast %203 : vector<1x8x32xf32> to vector<8x32xf32>
    %205 = vector.shape_cast %202 : vector<8x32xf32> to vector<1x8x32xf32>
    tpu.vector_store %arg7[%c3_58, %c0_59, %c0_60], %205 {strides = array<i32>} : memref<8x8x32xf32, #tpu.memory_space<vmem>>, vector<1x8x32xf32>,
    %c4 = arith.constant 4 : index
    %c0_61 = arith.constant 0 : index
    %c0_62 = arith.constant 0 : index
    %206 = vector.load %arg2[%c4, %c0_61, %c0_62] : memref<8x8x128xf32, #tpu.memory_space<vmem>>, vector<1x8x128xf32>
    %207 = vector.shape_cast %206 : vector<1x8x128xf32> to vector<8x128xf32>
    %cst_63 = arith.constant dense<0.000000e+00> : vector<8x128xf32>
    %208 = tpu.matmul %175, %3, %cst_63 {dimension_numbers = #tpu.dot_dimension_numbers<[1], [0], [0], [1], [0, 0, 1, 1], [], []>} : vector<8x32xf32>, vector<32x128xf32>, vector<8x128xf32> -> vector<8x128xf32>
    %209 = arith.addf %207, %208 : vector<8x128xf32>
    %210 = arith.negf %209 : vector<8x128xf32>
    %211 = math.exp %210 : vector<8x128xf32>
    %cst_64 = arith.constant 1.000000e+00 : f32
    %212 = vector.broadcast %cst_64 : f32 to vector<8x128xf32>
    %213 = arith.addf %212, %211 : vector<8x128xf32>
    %214 = arith.divf %212, %213 : vector<8x128xf32>
    %215 = math.tanh %209 : vector<8x128xf32>
    %216 = vector.extract_strided_slice %214 {offsets = [0, 0], sizes = [8, 32], strides = [1, 1]} : vector<8x128xf32> to vector<8x32xf32>
    %217 = vector.extract_strided_slice %214 {offsets = [0, 32], sizes = [8, 32], strides = [1, 1]} : vector<8x128xf32> to vector<8x32xf32>
    %218 = vector.extract_strided_slice %215 {offsets = [0, 64], sizes = [8, 32], strides = [1, 1]} : vector<8x128xf32> to vector<8x32xf32>
    %219 = vector.extract_strided_slice %214 {offsets = [0, 96], sizes = [8, 32], strides = [1, 1]} : vector<8x128xf32> to vector<8x32xf32>
    %220 = arith.mulf %217, %173 : vector<8x32xf32>
    %221 = arith.mulf %216, %218 : vector<8x32xf32>
    %222 = arith.addf %220, %221 : vector<8x32xf32>
    %223 = math.tanh %222 : vector<8x32xf32>
    %224 = arith.mulf %219, %223 : vector<8x32xf32>
    %c4_i32 = arith.constant 4 : i32
    %225 = arith.addi %7, %c4_i32 : i32
    %226 = vector.broadcast %225 : i32 to vector<8x1xi32>
    %227 = arith.cmpi slt, %226, %6 : vector<8x1xi32>
    %228 = arith.extui %227 : vector<8x1xi1> to vector<8x1xi32>
    %229 = arith.sitofp %228 : vector<8x1xi32> to vector<8x1xf32>
    %230 = vector.broadcast %229 : vector<8x1xf32> to vector<8x32xf32>
    %231 = arith.mulf %224, %230 : vector<8x32xf32>
    %cst_65 = arith.constant dense<0.000000e+00> : vector<8xf32>
    %232 = vector.multi_reduction <add>, %231, %cst_65 [1] : vector<8x32xf32> to vector<8xf32>
    %233 = vector.shape_cast %232 : vector<8xf32> to vector<8x1xf32>
    %cst_66 = arith.constant 3.125000e-02 : f32
    %234 = vector.broadcast %cst_66 : f32 to vector<8x1xf32>
    %235 = arith.mulf %233, %234 : vector<8x1xf32>
    %236 = vector.broadcast %235 : vector<8x1xf32> to vector<8x32xf32>
    %237 = arith.subf %231, %236 : vector<8x32xf32>
    %238 = arith.mulf %237, %237 : vector<8x32xf32>
    %cst_67 = arith.constant dense<0.000000e+00> : vector<8xf32>
    %239 = vector.multi_reduction <add>, %238, %cst_67 [1] : vector<8x32xf32> to vector<8xf32>
    %240 = vector.shape_cast %239 : vector<8xf32> to vector<8x1xf32>
    %cst_68 = arith.constant 3.125000e-02 : f32
    %241 = vector.broadcast %cst_68 : f32 to vector<8x1xf32>
    %242 = arith.mulf %240, %241 : vector<8x1xf32>
    %cst_69 = arith.constant 9.99999974E-6 : f32
    %243 = vector.broadcast %cst_69 : f32 to vector<8x1xf32>
    %244 = arith.addf %242, %243 : vector<8x1xf32>
    %245 = math.rsqrt %244 : vector<8x1xf32>
    %246 = vector.broadcast %245 : vector<8x1xf32> to vector<8x32xf32>
    %247 = arith.mulf %237, %246 : vector<8x32xf32>
    %248 = vector.broadcast %4 : vector<1x32xf32> to vector<8x32xf32>
    %249 = arith.mulf %247, %248 : vector<8x32xf32>
    %250 = vector.broadcast %5 : vector<1x32xf32> to vector<8x32xf32>
    %251 = arith.addf %249, %250 : vector<8x32xf32>
    %c4_70 = arith.constant 4 : index
    %c0_71 = arith.constant 0 : index
    %c0_72 = arith.constant 0 : index
    %252 = vector.load %arg7[%c4_70, %c0_71, %c0_72] : memref<8x8x32xf32, #tpu.memory_space<vmem>>, vector<1x8x32xf32>
    %253 = vector.shape_cast %252 : vector<1x8x32xf32> to vector<8x32xf32>
    %254 = vector.shape_cast %251 : vector<8x32xf32> to vector<1x8x32xf32>
    tpu.vector_store %arg7[%c4_70, %c0_71, %c0_72], %254 {strides = array<i32>} : memref<8x8x32xf32, #tpu.memory_space<vmem>>, vector<1x8x32xf32>,
    %c5 = arith.constant 5 : index
    %c0_73 = arith.constant 0 : index
    %c0_74 = arith.constant 0 : index
    %255 = vector.load %arg2[%c5, %c0_73, %c0_74] : memref<8x8x128xf32, #tpu.memory_space<vmem>>, vector<1x8x128xf32>
    %256 = vector.shape_cast %255 : vector<1x8x128xf32> to vector<8x128xf32>
    %cst_75 = arith.constant dense<0.000000e+00> : vector<8x128xf32>
    %257 = tpu.matmul %224, %3, %cst_75 {dimension_numbers = #tpu.dot_dimension_numbers<[1], [0], [0], [1], [0, 0, 1, 1], [], []>} : vector<8x32xf32>, vector<32x128xf32>, vector<8x128xf32> -> vector<8x128xf32>
    %258 = arith.addf %256, %257 : vector<8x128xf32>
    %259 = arith.negf %258 : vector<8x128xf32>
    %260 = math.exp %259 : vector<8x128xf32>
    %cst_76 = arith.constant 1.000000e+00 : f32
    %261 = vector.broadcast %cst_76 : f32 to vector<8x128xf32>
    %262 = arith.addf %261, %260 : vector<8x128xf32>
    %263 = arith.divf %261, %262 : vector<8x128xf32>
    %264 = math.tanh %258 : vector<8x128xf32>
    %265 = vector.extract_strided_slice %263 {offsets = [0, 0], sizes = [8, 32], strides = [1, 1]} : vector<8x128xf32> to vector<8x32xf32>
    %266 = vector.extract_strided_slice %263 {offsets = [0, 32], sizes = [8, 32], strides = [1, 1]} : vector<8x128xf32> to vector<8x32xf32>
    %267 = vector.extract_strided_slice %264 {offsets = [0, 64], sizes = [8, 32], strides = [1, 1]} : vector<8x128xf32> to vector<8x32xf32>
    %268 = vector.extract_strided_slice %263 {offsets = [0, 96], sizes = [8, 32], strides = [1, 1]} : vector<8x128xf32> to vector<8x32xf32>
    %269 = arith.mulf %266, %222 : vector<8x32xf32>
    %270 = arith.mulf %265, %267 : vector<8x32xf32>
    %271 = arith.addf %269, %270 : vector<8x32xf32>
    %272 = math.tanh %271 : vector<8x32xf32>
    %273 = arith.mulf %268, %272 : vector<8x32xf32>
    %c5_i32 = arith.constant 5 : i32
    %274 = arith.addi %7, %c5_i32 : i32
    %275 = vector.broadcast %274 : i32 to vector<8x1xi32>
    %276 = arith.cmpi slt, %275, %6 : vector<8x1xi32>
    %277 = arith.extui %276 : vector<8x1xi1> to vector<8x1xi32>
    %278 = arith.sitofp %277 : vector<8x1xi32> to vector<8x1xf32>
    %279 = vector.broadcast %278 : vector<8x1xf32> to vector<8x32xf32>
    %280 = arith.mulf %273, %279 : vector<8x32xf32>
    %cst_77 = arith.constant dense<0.000000e+00> : vector<8xf32>
    %281 = vector.multi_reduction <add>, %280, %cst_77 [1] : vector<8x32xf32> to vector<8xf32>
    %282 = vector.shape_cast %281 : vector<8xf32> to vector<8x1xf32>
    %cst_78 = arith.constant 3.125000e-02 : f32
    %283 = vector.broadcast %cst_78 : f32 to vector<8x1xf32>
    %284 = arith.mulf %282, %283 : vector<8x1xf32>
    %285 = vector.broadcast %284 : vector<8x1xf32> to vector<8x32xf32>
    %286 = arith.subf %280, %285 : vector<8x32xf32>
    %287 = arith.mulf %286, %286 : vector<8x32xf32>
    %cst_79 = arith.constant dense<0.000000e+00> : vector<8xf32>
    %288 = vector.multi_reduction <add>, %287, %cst_79 [1] : vector<8x32xf32> to vector<8xf32>
    %289 = vector.shape_cast %288 : vector<8xf32> to vector<8x1xf32>
    %cst_80 = arith.constant 3.125000e-02 : f32
    %290 = vector.broadcast %cst_80 : f32 to vector<8x1xf32>
    %291 = arith.mulf %289, %290 : vector<8x1xf32>
    %cst_81 = arith.constant 9.99999974E-6 : f32
    %292 = vector.broadcast %cst_81 : f32 to vector<8x1xf32>
    %293 = arith.addf %291, %292 : vector<8x1xf32>
    %294 = math.rsqrt %293 : vector<8x1xf32>
    %295 = vector.broadcast %294 : vector<8x1xf32> to vector<8x32xf32>
    %296 = arith.mulf %286, %295 : vector<8x32xf32>
    %297 = vector.broadcast %4 : vector<1x32xf32> to vector<8x32xf32>
    %298 = arith.mulf %296, %297 : vector<8x32xf32>
    %299 = vector.broadcast %5 : vector<1x32xf32> to vector<8x32xf32>
    %300 = arith.addf %298, %299 : vector<8x32xf32>
    %c5_82 = arith.constant 5 : index
    %c0_83 = arith.constant 0 : index
    %c0_84 = arith.constant 0 : index
    %301 = vector.load %arg7[%c5_82, %c0_83, %c0_84] : memref<8x8x32xf32, #tpu.memory_space<vmem>>, vector<1x8x32xf32>
    %302 = vector.shape_cast %301 : vector<1x8x32xf32> to vector<8x32xf32>
    %303 = vector.shape_cast %300 : vector<8x32xf32> to vector<1x8x32xf32>
    tpu.vector_store %arg7[%c5_82, %c0_83, %c0_84], %303 {strides = array<i32>} : memref<8x8x32xf32, #tpu.memory_space<vmem>>, vector<1x8x32xf32>,
    %c6 = arith.constant 6 : index
    %c0_85 = arith.constant 0 : index
    %c0_86 = arith.constant 0 : index
    %304 = vector.load %arg2[%c6, %c0_85, %c0_86] : memref<8x8x128xf32, #tpu.memory_space<vmem>>, vector<1x8x128xf32>
    %305 = vector.shape_cast %304 : vector<1x8x128xf32> to vector<8x128xf32>
    %cst_87 = arith.constant dense<0.000000e+00> : vector<8x128xf32>
    %306 = tpu.matmul %273, %3, %cst_87 {dimension_numbers = #tpu.dot_dimension_numbers<[1], [0], [0], [1], [0, 0, 1, 1], [], []>} : vector<8x32xf32>, vector<32x128xf32>, vector<8x128xf32> -> vector<8x128xf32>
    %307 = arith.addf %305, %306 : vector<8x128xf32>
    %308 = arith.negf %307 : vector<8x128xf32>
    %309 = math.exp %308 : vector<8x128xf32>
    %cst_88 = arith.constant 1.000000e+00 : f32
    %310 = vector.broadcast %cst_88 : f32 to vector<8x128xf32>
    %311 = arith.addf %310, %309 : vector<8x128xf32>
    %312 = arith.divf %310, %311 : vector<8x128xf32>
    %313 = math.tanh %307 : vector<8x128xf32>
    %314 = vector.extract_strided_slice %312 {offsets = [0, 0], sizes = [8, 32], strides = [1, 1]} : vector<8x128xf32> to vector<8x32xf32>
    %315 = vector.extract_strided_slice %312 {offsets = [0, 32], sizes = [8, 32], strides = [1, 1]} : vector<8x128xf32> to vector<8x32xf32>
    %316 = vector.extract_strided_slice %313 {offsets = [0, 64], sizes = [8, 32], strides = [1, 1]} : vector<8x128xf32> to vector<8x32xf32>
    %317 = vector.extract_strided_slice %312 {offsets = [0, 96], sizes = [8, 32], strides = [1, 1]} : vector<8x128xf32> to vector<8x32xf32>
    %318 = arith.mulf %315, %271 : vector<8x32xf32>
    %319 = arith.mulf %314, %316 : vector<8x32xf32>
    %320 = arith.addf %318, %319 : vector<8x32xf32>
    %321 = math.tanh %320 : vector<8x32xf32>
    %322 = arith.mulf %317, %321 : vector<8x32xf32>
    %c6_i32 = arith.constant 6 : i32
    %323 = arith.addi %7, %c6_i32 : i32
    %324 = vector.broadcast %323 : i32 to vector<8x1xi32>
    %325 = arith.cmpi slt, %324, %6 : vector<8x1xi32>
    %326 = arith.extui %325 : vector<8x1xi1> to vector<8x1xi32>
    %327 = arith.sitofp %326 : vector<8x1xi32> to vector<8x1xf32>
    %328 = vector.broadcast %327 : vector<8x1xf32> to vector<8x32xf32>
    %329 = arith.mulf %322, %328 : vector<8x32xf32>
    %cst_89 = arith.constant dense<0.000000e+00> : vector<8xf32>
    %330 = vector.multi_reduction <add>, %329, %cst_89 [1] : vector<8x32xf32> to vector<8xf32>
    %331 = vector.shape_cast %330 : vector<8xf32> to vector<8x1xf32>
    %cst_90 = arith.constant 3.125000e-02 : f32
    %332 = vector.broadcast %cst_90 : f32 to vector<8x1xf32>
    %333 = arith.mulf %331, %332 : vector<8x1xf32>
    %334 = vector.broadcast %333 : vector<8x1xf32> to vector<8x32xf32>
    %335 = arith.subf %329, %334 : vector<8x32xf32>
    %336 = arith.mulf %335, %335 : vector<8x32xf32>
    %cst_91 = arith.constant dense<0.000000e+00> : vector<8xf32>
    %337 = vector.multi_reduction <add>, %336, %cst_91 [1] : vector<8x32xf32> to vector<8xf32>
    %338 = vector.shape_cast %337 : vector<8xf32> to vector<8x1xf32>
    %cst_92 = arith.constant 3.125000e-02 : f32
    %339 = vector.broadcast %cst_92 : f32 to vector<8x1xf32>
    %340 = arith.mulf %338, %339 : vector<8x1xf32>
    %cst_93 = arith.constant 9.99999974E-6 : f32
    %341 = vector.broadcast %cst_93 : f32 to vector<8x1xf32>
    %342 = arith.addf %340, %341 : vector<8x1xf32>
    %343 = math.rsqrt %342 : vector<8x1xf32>
    %344 = vector.broadcast %343 : vector<8x1xf32> to vector<8x32xf32>
    %345 = arith.mulf %335, %344 : vector<8x32xf32>
    %346 = vector.broadcast %4 : vector<1x32xf32> to vector<8x32xf32>
    %347 = arith.mulf %345, %346 : vector<8x32xf32>
    %348 = vector.broadcast %5 : vector<1x32xf32> to vector<8x32xf32>
    %349 = arith.addf %347, %348 : vector<8x32xf32>
    %c6_94 = arith.constant 6 : index
    %c0_95 = arith.constant 0 : index
    %c0_96 = arith.constant 0 : index
    %350 = vector.load %arg7[%c6_94, %c0_95, %c0_96] : memref<8x8x32xf32, #tpu.memory_space<vmem>>, vector<1x8x32xf32>
    %351 = vector.shape_cast %350 : vector<1x8x32xf32> to vector<8x32xf32>
    %352 = vector.shape_cast %349 : vector<8x32xf32> to vector<1x8x32xf32>
    tpu.vector_store %arg7[%c6_94, %c0_95, %c0_96], %352 {strides = array<i32>} : memref<8x8x32xf32, #tpu.memory_space<vmem>>, vector<1x8x32xf32>,
    %c7 = arith.constant 7 : index
    %c0_97 = arith.constant 0 : index
    %c0_98 = arith.constant 0 : index
    %353 = vector.load %arg2[%c7, %c0_97, %c0_98] : memref<8x8x128xf32, #tpu.memory_space<vmem>>, vector<1x8x128xf32>
    %354 = vector.shape_cast %353 : vector<1x8x128xf32> to vector<8x128xf32>
    %cst_99 = arith.constant dense<0.000000e+00> : vector<8x128xf32>
    %355 = tpu.matmul %322, %3, %cst_99 {dimension_numbers = #tpu.dot_dimension_numbers<[1], [0], [0], [1], [0, 0, 1, 1], [], []>} : vector<8x32xf32>, vector<32x128xf32>, vector<8x128xf32> -> vector<8x128xf32>
    %356 = arith.addf %354, %355 : vector<8x128xf32>
    %357 = arith.negf %356 : vector<8x128xf32>
    %358 = math.exp %357 : vector<8x128xf32>
    %cst_100 = arith.constant 1.000000e+00 : f32
    %359 = vector.broadcast %cst_100 : f32 to vector<8x128xf32>
    %360 = arith.addf %359, %358 : vector<8x128xf32>
    %361 = arith.divf %359, %360 : vector<8x128xf32>
    %362 = math.tanh %356 : vector<8x128xf32>
    %363 = vector.extract_strided_slice %361 {offsets = [0, 0], sizes = [8, 32], strides = [1, 1]} : vector<8x128xf32> to vector<8x32xf32>
    %364 = vector.extract_strided_slice %361 {offsets = [0, 32], sizes = [8, 32], strides = [1, 1]} : vector<8x128xf32> to vector<8x32xf32>
    %365 = vector.extract_strided_slice %362 {offsets = [0, 64], sizes = [8, 32], strides = [1, 1]} : vector<8x128xf32> to vector<8x32xf32>
    %366 = vector.extract_strided_slice %361 {offsets = [0, 96], sizes = [8, 32], strides = [1, 1]} : vector<8x128xf32> to vector<8x32xf32>
    %367 = arith.mulf %364, %320 : vector<8x32xf32>
    %368 = arith.mulf %363, %365 : vector<8x32xf32>
    %369 = arith.addf %367, %368 : vector<8x32xf32>
    %370 = math.tanh %369 : vector<8x32xf32>
    %371 = arith.mulf %366, %370 : vector<8x32xf32>
    %c7_i32 = arith.constant 7 : i32
    %372 = arith.addi %7, %c7_i32 : i32
    %373 = vector.broadcast %372 : i32 to vector<8x1xi32>
    %374 = arith.cmpi slt, %373, %6 : vector<8x1xi32>
    %375 = arith.extui %374 : vector<8x1xi1> to vector<8x1xi32>
    %376 = arith.sitofp %375 : vector<8x1xi32> to vector<8x1xf32>
    %377 = vector.broadcast %376 : vector<8x1xf32> to vector<8x32xf32>
    %378 = arith.mulf %371, %377 : vector<8x32xf32>
    %cst_101 = arith.constant dense<0.000000e+00> : vector<8xf32>
    %379 = vector.multi_reduction <add>, %378, %cst_101 [1] : vector<8x32xf32> to vector<8xf32>
    %380 = vector.shape_cast %379 : vector<8xf32> to vector<8x1xf32>
    %cst_102 = arith.constant 3.125000e-02 : f32
    %381 = vector.broadcast %cst_102 : f32 to vector<8x1xf32>
    %382 = arith.mulf %380, %381 : vector<8x1xf32>
    %383 = vector.broadcast %382 : vector<8x1xf32> to vector<8x32xf32>
    %384 = arith.subf %378, %383 : vector<8x32xf32>
    %385 = arith.mulf %384, %384 : vector<8x32xf32>
    %cst_103 = arith.constant dense<0.000000e+00> : vector<8xf32>
    %386 = vector.multi_reduction <add>, %385, %cst_103 [1] : vector<8x32xf32> to vector<8xf32>
    %387 = vector.shape_cast %386 : vector<8xf32> to vector<8x1xf32>
    %cst_104 = arith.constant 3.125000e-02 : f32
    %388 = vector.broadcast %cst_104 : f32 to vector<8x1xf32>
    %389 = arith.mulf %387, %388 : vector<8x1xf32>
    %cst_105 = arith.constant 9.99999974E-6 : f32
    %390 = vector.broadcast %cst_105 : f32 to vector<8x1xf32>
    %391 = arith.addf %389, %390 : vector<8x1xf32>
    %392 = math.rsqrt %391 : vector<8x1xf32>
    %393 = vector.broadcast %392 : vector<8x1xf32> to vector<8x32xf32>
    %394 = arith.mulf %384, %393 : vector<8x32xf32>
    %395 = vector.broadcast %4 : vector<1x32xf32> to vector<8x32xf32>
    %396 = arith.mulf %394, %395 : vector<8x32xf32>
    %397 = vector.broadcast %5 : vector<1x32xf32> to vector<8x32xf32>
    %398 = arith.addf %396, %397 : vector<8x32xf32>
    %c7_106 = arith.constant 7 : index
    %c0_107 = arith.constant 0 : index
    %c0_108 = arith.constant 0 : index
    %399 = vector.load %arg7[%c7_106, %c0_107, %c0_108] : memref<8x8x32xf32, #tpu.memory_space<vmem>>, vector<1x8x32xf32>
    %400 = vector.shape_cast %399 : vector<1x8x32xf32> to vector<8x32xf32>
    %401 = vector.shape_cast %398 : vector<8x32xf32> to vector<1x8x32xf32>
    tpu.vector_store %arg7[%c7_106, %c0_107, %c0_108], %401 {strides = array<i32>} : memref<8x8x32xf32, #tpu.memory_space<vmem>>, vector<1x8x32xf32>,
    %c0_109 = arith.constant 0 : index
    %c0_110 = arith.constant 0 : index
    %402 = vector.load %arg8[%c0_109, %c0_110] : memref<8x32xf32, #tpu.memory_space<vmem>>, vector<8x32xf32>
    tpu.vector_store %arg8[%c0_109, %c0_110], %371 {strides = array<i32>} : memref<8x32xf32, #tpu.memory_space<vmem>>, vector<8x32xf32>,
    %c0_111 = arith.constant 0 : index
    %c0_112 = arith.constant 0 : index
    %403 = vector.load %arg9[%c0_111, %c0_112] : memref<8x32xf32, #tpu.memory_space<vmem>>, vector<8x32xf32>
    tpu.vector_store %arg9[%c0_111, %c0_112], %369 {strides = array<i32>} : memref<8x32xf32, #tpu.memory_space<vmem>>, vector<8x32xf32>,
    return
  }
  func.func @transform_0(%arg0: i32, %arg1: i32) -> (i32, i32, i32) {
    %c0_i32 = arith.constant 0 : i32
    %c0_i32_0 = arith.constant 0 : i32
    return %arg1, %arg0, %c0_i32 : i32, i32, i32
  }
  func.func @transform_1(%arg0: i32, %arg1: i32) -> (i32, i32) {
    %c0_i32 = arith.constant 0 : i32
    %c0_i32_0 = arith.constant 0 : i32
    %c0_i32_1 = arith.constant 0 : i32
    return %c0_i32, %c0_i32_0 : i32, i32
  }
  func.func @transform_2(%arg0: i32, %arg1: i32) -> (i32, i32) {
    %c0_i32 = arith.constant 0 : i32
    %c0_i32_0 = arith.constant 0 : i32
    return %arg0, %c0_i32 : i32, i32
  }
  func.func @transform_3(%arg0: i32, %arg1: i32) -> (i32, i32) {
    %c0_i32 = arith.constant 0 : i32
    %c0_i32_0 = arith.constant 0 : i32
    %c0_i32_1 = arith.constant 0 : i32
    return %c0_i32, %c0_i32_0 : i32, i32
  }
  func.func @transform_4(%arg0: i32, %arg1: i32) -> (i32, i32) {
    %c0_i32 = arith.constant 0 : i32
    %c0_i32_0 = arith.constant 0 : i32
    %c0_i32_1 = arith.constant 0 : i32
    return %c0_i32, %c0_i32_0 : i32, i32
  }
  func.func @transform_5(%arg0: i32, %arg1: i32) -> (i32, i32, i32) {
    %c0_i32 = arith.constant 0 : i32
    %c0_i32_0 = arith.constant 0 : i32
    return %arg1, %arg0, %c0_i32 : i32, i32, i32
  }
}

</mosaic_0001>

<llo_original>
// kernel: tpu_custom_call.1
$region0: #{tpu_custom_call.1}
  #allocation0 [shape = 'u32[]', space=smem, size = 0x4, offset = 0x4, fixed_abs, tag = 'smem constant byte address 0x4 - core index']
  #allocation1 [shape = 'u32[144,128]{1,0:T(1,128)}', space=vmem, size = 0x12000, scoped, tag = 'internal scratch']
  #allocation2 [shape = 'f32[8,32]{1,0:T(8,128)}', space=vmem, size = 0x1000, scoped, tag = 'scratch operand']
  #allocation3 [shape = 'f32[8,32]{1,0:T(8,128)}', space=vmem, size = 0x1000, scoped, tag = 'scratch operand']
  %s0 = inlined_call_operand.hbm [shape: f32[8,8,128], index: 0, kind: input, shape index: {}]
  %s1 = inlined_call_operand.hbm [shape: f32[32,128], index: 1, kind: input, shape index: {}]
  %s2 = inlined_call_operand.vmem [shape: s32[8,1], index: 2, kind: input, shape index: {}]
  %s3 = inlined_call_operand.vmem [shape: f32[1,32], index: 3, kind: input, shape index: {}]
  %s4 = inlined_call_operand.vmem [shape: f32[1,32], index: 4, kind: input, shape index: {}]
  %s5 = inlined_call_operand.hbm [shape: f32[8,8,32], index: 5, kind: output, shape index: {}]
  %s6 = sld [smem:[#allocation0]]
  $region42: #{tpu_custom_call.1} parent=0
    _
  %s8 = ssub.s32 1, %s6
  %s9 = scalar_select 0, %s8, %s6
  $region1: #{tpu_custom_call.1} parent=0
    #allocation4 [shape = 'u8[32768]{0}', space=vmem, size = 0x8000, scoped, tag = 'input window, operand 0, single buffered']
    #allocation5 [shape = 's32[1]{0}', space=sflag, size = 0x4, scoped, tag = 'scoped memory for tpu_custom_call.1']
    #allocation6 [shape = 's32[1]{0}', space=sflag, size = 0x4, scoped, tag = 'scoped memory for tpu_custom_call.1']
    #allocation7 [shape = 'u8[16384]{0}', space=vmem, size = 0x4000, scoped, tag = 'input window, operand 1, single buffered']
    #allocation8 [shape = 's32[1]{0}', space=sflag, size = 0x4, scoped, tag = 'scoped memory for tpu_custom_call.1']
    #allocation9 [shape = 'u8[32768]{0}', space=vmem, size = 0x8000, scoped, tag = 'output window, operand 0, single buffered']
    %10 = vsyncpa [#allocation5], 0
    %11 = vsyncpa [#allocation8], 0
    %12 = vsyncpa [#allocation6], 0
    // Predicated region
    $region2: #{tpu_custom_call.1} parent=1 // pred_check
      _
    $region3: #{tpu_custom_call.1} parent=1 // pred_check_branch
      %14 = sbr.rel (0) target = $region5
    $region4: #{tpu_custom_call.1} parent=1 // pred_region
      %s16 = ssub.s32 1024, 1024
      %17 = vsyncadd [#allocation5], %s16
      %s18 = sshll.u32 [#allocation4], 4
      %s19 = int_to_ptr.vmem [resolvable:$true] %s18
      %24 = dma.hbm_to_vmem [thread:$0]  %s0, 1024, %s19, [#allocation5], 128, 128, 8
    $region5: #{tpu_custom_call.1} parent=1 // pred_fallthru
      _
    // Predicated region
    $region6: #{tpu_custom_call.1} parent=1 // pred_check
      _
    $region7: #{tpu_custom_call.1} parent=1 // pred_check_branch
      %26 = sbr.rel (0) target = $region9
    $region8: #{tpu_custom_call.1} parent=1 // pred_region
      %s28 = ssub.s32 512, 512
      %29 = vsyncadd [#allocation8], %s28
      %s30 = sshll.u32 [#allocation7], 4
      %s31 = int_to_ptr.vmem [resolvable:$true] %s30
      %36 = dma.hbm_to_vmem [thread:$0]  %s1, 512, %s31, [#allocation8], 128, 128, 8
    $region9: #{tpu_custom_call.1} parent=1 // pred_fallthru
      _
    // Predicated region
    $region10: #{tpu_custom_call.1} parent=1 // pred_check
      _
    $region11: #{tpu_custom_call.1} parent=1 // pred_check_branch
      %38 = sbr.rel (0) target = $region13
    $region12: #{tpu_custom_call.1} parent=1 // pred_region
      _
    $region13: #{tpu_custom_call.1} parent=1 // pred_fallthru
      _
    // Predicated region
    $region14: #{tpu_custom_call.1} parent=1 // pred_check
      _
    $region15: #{tpu_custom_call.1} parent=1 // pred_check_branch
      %40 = sbr.rel (0) target = $region17
    $region16: #{tpu_custom_call.1} parent=1 // pred_region
      _
    $region17: #{tpu_custom_call.1} parent=1 // pred_fallthru
      _
    // Predicated region
    $region18: #{tpu_custom_call.1} parent=1 // pred_check
      _
    $region19: #{tpu_custom_call.1} parent=1 // pred_check_branch
      %42 = sbr.rel (0) target = $region21
    $region20: #{tpu_custom_call.1} parent=1 // pred_region
      _
    $region21: #{tpu_custom_call.1} parent=1 // pred_fallthru
      _
    // Predicated region
    $region22: #{tpu_custom_call.1} parent=1 // pred_check
      _
    $region23: #{tpu_custom_call.1} parent=1 // pred_check_branch
      %44 = sbr.rel (0) target = $region25
    $region24: #{tpu_custom_call.1} parent=1 // pred_region
      %45 = dma.done [#allocation5], 1024
    $region25: #{tpu_custom_call.1} parent=1 // pred_fallthru
      _
    // Predicated region
    $region26: #{tpu_custom_call.1} parent=1 // pred_check
      _
    $region27: #{tpu_custom_call.1} parent=1 // pred_check_branch
      %47 = sbr.rel (0) target = $region29
    $region28: #{tpu_custom_call.1} parent=1 // pred_region
      %48 = dma.done [#allocation8], 512
    $region29: #{tpu_custom_call.1} parent=1 // pred_fallthru
      _
    %p49 = scmp.eq.s32.totalorder 0, 0
    // Predicated region
    $region30: #{tpu_custom_call.1} parent=1 // pred_check
      %p50 = pneg %p49
    $region31: #{tpu_custom_call.1} parent=1 // pred_check_branch
      %52 = sbr.rel (%p50) target = $region33
    $region32: #{tpu_custom_call.1} parent=1 // pred_region
      %vm53 = vcmask 261120
      %54 = vst.msk [vmem:[#allocation2] sm:$0xff] %vm53, 0.0
      %55 = vst.msk [vmem:[#allocation3] sm:$0xff] %vm53, 0.0
    $region33: #{tpu_custom_call.1} parent=1 // pred_fallthru
      _
    %v56 = vld [vmem:[#allocation7] sm:$0xff]
    %v57 = vld [vmem:[#allocation7 + $0x8] sm:$0xff]
    %v58 = vld [vmem:[#allocation7 + $0x10] sm:$0xff]
    %v59 = vld [vmem:[#allocation7 + $0x18] sm:$0xff]
    %v60 = vld [vmem:[%s3] sm:$0x1]
    %v61 = vld [vmem:[%s4] sm:$0x1]
    %v62 = vld [vmem:[%s2] sm:$0xff]
    %s63 = smul.u32 0, 8
    %v64 = vld [vmem:[#allocation2] sm:$0xff]
    %v65 = vld [vmem:[#allocation3] sm:$0xff]
    %v66 = vld [vmem:[#allocation4] sm:$0xff]
    %vm67 = vcmask 261120
    %v69 = vsel %vm67, %v64, 0
    %71 = vmatprep.subr.mxu0 0.0
    %72 = vmatpush1.msra.mxu0 %v56
    %73 = vmatprep.subr.mxu0 0.0
    %74 = vmatpush1.msra.mxu0 %v57
    %75 = vmatprep.subr.mxu0 0.0
    %76 = vmatpush1.msra.mxu0 %v58
    %77 = vmatprep.subr.mxu0 0.0
    %78 = vmatpush1.msra.mxu0 %v59
    %79 = vmatprep.subr.mxu0 0.0
    %80 = vmatpush1.msra.mxu0 0.0
    %81 = vmatprep.subr.mxu0 0.0
    %82 = vmatpush1.msra.mxu0 0.0
    %83 = vmatprep.subr.mxu0 0.0
    %84 = vmatpush1.msra.mxu0 0.0
    %85 = vmatprep.subr.mxu0 0.0
    %86 = vmatpush1.msra.mxu0 0.0
    %87 = vmatprep.subr.mxu0 0.0
    %88 = vmatpush1.msra.mxu0 0.0
    %89 = vmatprep.subr.mxu0 0.0
    %90 = vmatpush1.msra.mxu0 0.0
    %91 = vmatprep.subr.mxu0 0.0
    %92 = vmatpush1.msra.mxu0 0.0
    %93 = vmatprep.subr.mxu0 0.0
    %94 = vmatpush1.msra.mxu0 0.0
    %95 = vmatprep.subr.mxu0 0.0
    %96 = vmatpush1.msra.mxu0 0.0
    %97 = vmatprep.subr.mxu0 0.0
    %98 = vmatpush1.msra.mxu0 0.0
    %99 = vmatprep.subr.mxu0 0.0
    %100 = vmatpush1.msra.mxu0 0.0
    %101 = vmatprep.subr.mxu0 0.0
    %102 = vmatpush1.msra.mxu0 0.0
    %103 = vmatprep.subr.mxu0 0.0
    %104 = vmatpush1.msra.mxu0 0.0
    %105 = vmatprep.subr.mxu0 0.0
    %106 = vmatpush1.msra.mxu0 0.0
    %107 = vmatprep.subr.mxu0 0.0
    %108 = vmatpush1.msra.mxu0 0.0
    %109 = vmatprep.subr.mxu0 0.0
    %110 = vmatpush1.msra.mxu0 0.0
    %111 = vmatprep.subr.mxu0 0.0
    %112 = vmatpush1.msra.mxu0 0.0
    %113 = vmatprep.subr.mxu0 0.0
    %114 = vmatpush1.msra.mxu0 0.0
    %115 = vmatprep.subr.mxu0 0.0
    %116 = vmatpush1.msra.mxu0 0.0
    %117 = vmatprep.subr.mxu0 0.0
    %118 = vmatpush1.msra.mxu0 0.0
    %119 = vmatprep.subr.mxu0 0.0
    %120 = vmatpush1.msra.mxu0 0.0
    %121 = vmatprep.subr.mxu0 0.0
    %122 = vmatpush1.msra.mxu0 0.0
    %123 = vmatprep.subr.mxu0 0.0
    %124 = vmatpush1.msra.mxu0 0.0
    %125 = vmatprep.subr.mxu0 0.0
    %126 = vmatpush1.msra.mxu0 0.0
    %127 = vmatprep.subr.mxu0 0.0
    %128 = vmatpush1.msra.mxu0 0.0
    %129 = vmatprep.subr.mxu0 0.0
    %130 = vmatpush1.msra.mxu0 0.0
    %131 = vmatprep.subr.mxu0 0.0
    %132 = vmatpush1.msra.mxu0 0.0
    %133 = vmatprep.subr.mxu0 0.0
    %134 = vmatpush1.msra.mxu0 0.0
    %135 = vmatprep.mubr.f32.mxu0 0.0
    %136 = vmatmul.mubr.f32.gmra.mrb[0].mxu0 %v69
    %v137 = vpop.f32.mrb[0].mxu0
    %v138 = vadd.f32 0.0, %v137
    %v139 = vpop.f32.mrb[0].mxu0
    %140 = vdwg.mxu0
    %v141 = vadd.f32 %v66, %v138
    %v142 = vxor.u32 %v141, 2147483648
    %v143 = vmul.f32 %v142, 1.442695
    %v144 = vpow.pop %v143
    %v145 = vadd.f32 %v144, 1.0
    %v146 = vrcp.pop %v145
    %v147 = vmul.f32 1.0, %v146
    %v148 = vtanh.pop %v141
    %150 = vrot.lane.b32.xlu0 %v65, 32
    %v151 = vpop.permute.xlu0 %150
    %v153 = vmul.f32 %v147, %v151
    %155 = vrot.lane.b32.xlu0 %v148, 64
    %v156 = vpop.permute.xlu0 %155
    %v158 = vmul.f32 %v147, %v156
    %160 = vrot.lane.b32.xlu0 %v158, 32
    %v161 = vpop.permute.xlu0 %160
    %v163 = vadd.f32 %v153, %v161
    %v164 = vtanh.pop %v163
    %166 = vrot.lane.b32.xlu0 %v164, 64
    %v167 = vpop.permute.xlu0 %166
    %v169 = vmul.f32 %v147, %v167
    %v170 = vstv %s63
    %vm171 = vcmp.lt.s32.totalorder %v170, %v62
    %v172 = vsel %vm171, 1, 0
    %v173 = vcvt.s32.f32 %v172
    %175 = vset.pattern.permute.xlu0 0
    %176 = vperm.xlu0 %175, %v173
    %v177 = vpop.permute.xlu0 %176
    %v179 = vmul.f32 %v169, %v177
    %181 = vrot.lane.b32.xlu0 %v179, 32
    %v182 = vpop.permute.xlu0 %181
    %v184 = vsel %vm67, %v182, 0.0
    %185 = vadd.xlane.f32.xlu0 %v184
    %v186 = vpop.xlane.xlu0 %185
    %v187 = vmul.f32 %v186, 0.03125
    %v188 = vsub.f32 %v179, %v187
    %v189 = vmul.f32 %v188, %v188
    %191 = vrot.lane.b32.xlu0 %v189, 32
    %v192 = vpop.permute.xlu0 %191
    %v194 = vsel %vm67, %v192, 0.0
    %195 = vadd.xlane.f32.xlu0 %v194
    %v196 = vpop.xlane.xlu0 %195
    %v197 = vmul.f32 %v196, 0.03125
    %v198 = vadd.f32 %v197, 1e-05
    %v199 = vrsqrt.pop %v198
    %v200 = vmul.f32 %v188, %v199
    %v202 = vlaneseq
    %v203 = vshrl.u32 %v202, 7
    %v204 = vsub.s32 0, %v203
    %v205 = vrot.slane %v60, %v204
    %206 = vrot.lane.b32.xlu0 %v205, 96
    %v207 = vpop.permute.xlu0 %206
    %v209 = vmul.f32 %v200, %v207
    %v211 = vlaneseq
    %v212 = vshrl.u32 %v211, 7
    %v213 = vsub.s32 0, %v212
    %v214 = vrot.slane %v61, %v213
    %215 = vrot.lane.b32.xlu0 %v214, 96
    %v216 = vpop.permute.xlu0 %215
    %v218 = vadd.f32 %v209, %v216
    %220 = vrot.lane.b32.xlu0 %v218, 32
    %v221 = vpop.permute.xlu0 %220
    %223 = vst.msk [vmem:[#allocation9] sm:$0xff] %vm67, %v221
    %s224 = scalar_lea.vmem [#allocation4], 8
    %v225 = vld [vmem:[%s224] sm:$0xff]
    %227 = vrot.lane.b32.xlu0 %v169, 32
    %v228 = vpop.permute.xlu0 %227
    %v229 = vsel %vm67, %v228, 0
    %231 = vmatprep.subr.mxu0 0.0
    %232 = vmatpush1.msra.mxu0 %v56
    %233 = vmatprep.subr.mxu0 0.0
    %234 = vmatpush1.msra.mxu0 %v57
    %235 = vmatprep.subr.mxu0 0.0
    %236 = vmatpush1.msra.mxu0 %v58
    %237 = vmatprep.subr.mxu0 0.0
    %238 = vmatpush1.msra.mxu0 %v59
    %239 = vmatprep.subr.mxu0 0.0
    %240 = vmatpush1.msra.mxu0 0.0
    %241 = vmatprep.subr.mxu0 0.0
    %242 = vmatpush1.msra.mxu0 0.0
    %243 = vmatprep.subr.mxu0 0.0
    %244 = vmatpush1.msra.mxu0 0.0
    %245 = vmatprep.subr.mxu0 0.0
    %246 = vmatpush1.msra.mxu0 0.0
    %247 = vmatprep.subr.mxu0 0.0
    %248 = vmatpush1.msra.mxu0 0.0
    %249 = vmatprep.subr.mxu0 0.0
    %250 = vmatpush1.msra.mxu0 0.0
    %251 = vmatprep.subr.mxu0 0.0
    %252 = vmatpush1.msra.mxu0 0.0
    %253 = vmatprep.subr.mxu0 0.0
    %254 = vmatpush1.msra.mxu0 0.0
    %255 = vmatprep.subr.mxu0 0.0
    %256 = vmatpush1.msra.mxu0 0.0
    %257 = vmatprep.subr.mxu0 0.0
    %258 = vmatpush1.msra.mxu0 0.0
    %259 = vmatprep.subr.mxu0 0.0
    %260 = vmatpush1.msra.mxu0 0.0
    %261 = vmatprep.subr.mxu0 0.0
    %262 = vmatpush1.msra.mxu0 0.0
    %263 = vmatprep.subr.mxu0 0.0
    %264 = vmatpush1.msra.mxu0 0.0
    %265 = vmatprep.subr.mxu0 0.0
    %266 = vmatpush1.msra.mxu0 0.0
    %267 = vmatprep.subr.mxu0 0.0
    %268 = vmatpush1.msra.mxu0 0.0
    %269 = vmatprep.subr.mxu0 0.0
    %270 = vmatpush1.msra.mxu0 0.0
    %271 = vmatprep.subr.mxu0 0.0
    %272 = vmatpush1.msra.mxu0 0.0
    %273 = vmatprep.subr.mxu0 0.0
    %274 = vmatpush1.msra.mxu0 0.0
    %275 = vmatprep.subr.mxu0 0.0
    %276 = vmatpush1.msra.mxu0 0.0
    %277 = vmatprep.subr.mxu0 0.0
    %278 = vmatpush1.msra.mxu0 0.0
    %279 = vmatprep.subr.mxu0 0.0
    %280 = vmatpush1.msra.mxu0 0.0
    %281 = vmatprep.subr.mxu0 0.0
    %282 = vmatpush1.msra.mxu0 0.0
    %283 = vmatprep.subr.mxu0 0.0
    %284 = vmatpush1.msra.mxu0 0.0
    %285 = vmatprep.subr.mxu0 0.0
    %286 = vmatpush1.msra.mxu0 0.0
    %287 = vmatprep.subr.mxu0 0.0
    %288 = vmatpush1.msra.mxu0 0.0
    %289 = vmatprep.subr.mxu0 0.0
    %290 = vmatpush1.msra.mxu0 0.0
    %291 = vmatprep.subr.mxu0 0.0
    %292 = vmatpush1.msra.mxu0 0.0
    %293 = vmatprep.subr.mxu0 0.0
    %294 = vmatpush1.msra.mxu0 0.0
    %295 = vmatprep.mubr.f32.mxu0 0.0
    %296 = vmatmul.mubr.f32.gmra.mrb[0].mxu0 %v229
    %v297 = vpop.f32.mrb[0].mxu0
    %v298 = vadd.f32 0.0, %v297
    %v299 = vpop.f32.mrb[0].mxu0
    %300 = vdwg.mxu0
    %v301 = vadd.f32 %v225, %v298
    %v302 = vxor.u32 %v301, 2147483648
    %v303 = vmul.f32 %v302, 1.442695
    %v304 = vpow.pop %v303
    %v305 = vadd.f32 %v304, 1.0
    %v306 = vrcp.pop %v305
    %v307 = vmul.f32 1.0, %v306
    %v308 = vtanh.pop %v301
    %v309 = vmul.f32 %v307, %v163
    %311 = vrot.lane.b32.xlu0 %v308, 64
    %v312 = vpop.permute.xlu0 %311
    %v314 = vmul.f32 %v307, %v312
    %316 = vrot.lane.b32.xlu0 %v314, 32
    %v317 = vpop.permute.xlu0 %316
    %v319 = vadd.f32 %v309, %v317
    %v320 = vtanh.pop %v319
    %322 = vrot.lane.b32.xlu0 %v320, 64
    %v323 = vpop.permute.xlu0 %322
    %v325 = vmul.f32 %v307, %v323
    %s326 = sadd.s32 %s63, 1
    %v327 = vstv %s326
    %vm328 = vcmp.lt.s32.totalorder %v327, %v62
    %v329 = vsel %vm328, 1, 0
    %v330 = vcvt.s32.f32 %v329
    %332 = vset.pattern.permute.xlu0 0
    %333 = vperm.xlu0 %332, %v330
    %v334 = vpop.permute.xlu0 %333
    %v336 = vmul.f32 %v325, %v334
    %338 = vrot.lane.b32.xlu0 %v336, 32
    %v339 = vpop.permute.xlu0 %338
    %v341 = vsel %vm67, %v339, 0.0
    %342 = vadd.xlane.f32.xlu0 %v341
    %v343 = vpop.xlane.xlu0 %342
    %v344 = vmul.f32 %v343, 0.03125
    %v345 = vsub.f32 %v336, %v344
    %v346 = vmul.f32 %v345, %v345
    %348 = vrot.lane.b32.xlu0 %v346, 32
    %v349 = vpop.permute.xlu0 %348
    %v351 = vsel %vm67, %v349, 0.0
    %352 = vadd.xlane.f32.xlu0 %v351
    %v353 = vpop.xlane.xlu0 %352
    %v354 = vmul.f32 %v353, 0.03125
    %v355 = vadd.f32 %v354, 1e-05
    %v356 = vrsqrt.pop %v355
    %v357 = vmul.f32 %v345, %v356
    %v358 = vmul.f32 %v357, %v207
    %v359 = vadd.f32 %v358, %v216
    %361 = vrot.lane.b32.xlu0 %v359, 32
    %v362 = vpop.permute.xlu0 %361
    %s364 = scalar_lea.vmem [#allocation9], 8
    %365 = vst.msk [vmem:[%s364] sm:$0xff] %vm67, %v362
    %s366 = scalar_lea.vmem [#allocation4], 16
    %v367 = vld [vmem:[%s366] sm:$0xff]
    %369 = vrot.lane.b32.xlu0 %v325, 32
    %v370 = vpop.permute.xlu0 %369
    %v371 = vsel %vm67, %v370, 0
    %373 = vmatprep.subr.mxu0 0.0
    %374 = vmatpush1.msra.mxu0 %v56
    %375 = vmatprep.subr.mxu0 0.0
    %376 = vmatpush1.msra.mxu0 %v57
    %377 = vmatprep.subr.mxu0 0.0
    %378 = vmatpush1.msra.mxu0 %v58
    %379 = vmatprep.subr.mxu0 0.0
    %380 = vmatpush1.msra.mxu0 %v59
    %381 = vmatprep.subr.mxu0 0.0
    %382 = vmatpush1.msra.mxu0 0.0
    %383 = vmatprep.subr.mxu0 0.0
    %384 = vmatpush1.msra.mxu0 0.0
    %385 = vmatprep.subr.mxu0 0.0
    %386 = vmatpush1.msra.mxu0 0.0
    %387 = vmatprep.subr.mxu0 0.0
    %388 = vmatpush1.msra.mxu0 0.0
    %389 = vmatprep.subr.mxu0 0.0
    %390 = vmatpush1.msra.mxu0 0.0
    %391 = vmatprep.subr.mxu0 0.0
    %392 = vmatpush1.msra.mxu0 0.0
    %393 = vmatprep.subr.mxu0 0.0
    %394 = vmatpush1.msra.mxu0 0.0
    %395 = vmatprep.subr.mxu0 0.0
    %396 = vmatpush1.msra.mxu0 0.0
    %397 = vmatprep.subr.mxu0 0.0
    %398 = vmatpush1.msra.mxu0 0.0
    %399 = vmatprep.subr.mxu0 0.0
    %400 = vmatpush1.msra.mxu0 0.0
    %401 = vmatprep.subr.mxu0 0.0
    %402 = vmatpush1.msra.mxu0 0.0
    %403 = vmatprep.subr.mxu0 0.0
    %404 = vmatpush1.msra.mxu0 0.0
    %405 = vmatprep.subr.mxu0 0.0
    %406 = vmatpush1.msra.mxu0 0.0
    %407 = vmatprep.subr.mxu0 0.0
    %408 = vmatpush1.msra.mxu0 0.0
    %409 = vmatprep.subr.mxu0 0.0
    %410 = vmatpush1.msra.mxu0 0.0
    %411 = vmatprep.subr.mxu0 0.0
    %412 = vmatpush1.msra.mxu0 0.0
    %413 = vmatprep.subr.mxu0 0.0
    %414 = vmatpush1.msra.mxu0 0.0
    %415 = vmatprep.subr.mxu0 0.0
    %416 = vmatpush1.msra.mxu0 0.0
    %417 = vmatprep.subr.mxu0 0.0
    %418 = vmatpush1.msra.mxu0 0.0
    %419 = vmatprep.subr.mxu0 0.0
    %420 = vmatpush1.msra.mxu0 0.0
    %421 = vmatprep.subr.mxu0 0.0
    %422 = vmatpush1.msra.mxu0 0.0
    %423 = vmatprep.subr.mxu0 0.0
    %424 = vmatpush1.msra.mxu0 0.0
    %425 = vmatprep.subr.mxu0 0.0
    %426 = vmatpush1.msra.mxu0 0.0
    %427 = vmatprep.subr.mxu0 0.0
    %428 = vmatpush1.msra.mxu0 0.0
    %429 = vmatprep.subr.mxu0 0.0
    %430 = vmatpush1.msra.mxu0 0.0
    %431 = vmatprep.subr.mxu0 0.0
    %432 = vmatpush1.msra.mxu0 0.0
    %433 = vmatprep.subr.mxu0 0.0
    %434 = vmatpush1.msra.mxu0 0.0
    %435 = vmatprep.subr.mxu0 0.0
    %436 = vmatpush1.msra.mxu0 0.0
    %437 = vmatprep.mubr.f32.mxu0 0.0
    %438 = vmatmul.mubr.f32.gmra.mrb[0].mxu0 %v371
    %v439 = vpop.f32.mrb[0].mxu0
    %v440 = vadd.f32 0.0, %v439
    %v441 = vpop.f32.mrb[0].mxu0
    %442 = vdwg.mxu0
    %v443 = vadd.f32 %v367, %v440
    %v444 = vxor.u32 %v443, 2147483648
    %v445 = vmul.f32 %v444, 1.442695
    %v446 = vpow.pop %v445
    %v447 = vadd.f32 %v446, 1.0
    %v448 = vrcp.pop %v447
    %v449 = vmul.f32 1.0, %v448
    %v450 = vtanh.pop %v443
    %v451 = vmul.f32 %v449, %v319
    %453 = vrot.lane.b32.xlu0 %v450, 64
    %v454 = vpop.permute.xlu0 %453
    %v456 = vmul.f32 %v449, %v454
    %458 = vrot.lane.b32.xlu0 %v456, 32
    %v459 = vpop.permute.xlu0 %458
    %v461 = vadd.f32 %v451, %v459
    %v462 = vtanh.pop %v461
    %464 = vrot.lane.b32.xlu0 %v462, 64
    %v465 = vpop.permute.xlu0 %464
    %v467 = vmul.f32 %v449, %v465
    %s468 = sadd.s32 %s63, 2
    %v469 = vstv %s468
    %vm470 = vcmp.lt.s32.totalorder %v469, %v62
    %v471 = vsel %vm470, 1, 0
    %v472 = vcvt.s32.f32 %v471
    %474 = vset.pattern.permute.xlu0 0
    %475 = vperm.xlu0 %474, %v472
    %v476 = vpop.permute.xlu0 %475
    %v478 = vmul.f32 %v467, %v476
    %480 = vrot.lane.b32.xlu0 %v478, 32
    %v481 = vpop.permute.xlu0 %480
    %v483 = vsel %vm67, %v481, 0.0
    %484 = vadd.xlane.f32.xlu0 %v483
    %v485 = vpop.xlane.xlu0 %484
    %v486 = vmul.f32 %v485, 0.03125
    %v487 = vsub.f32 %v478, %v486
    %v488 = vmul.f32 %v487, %v487
    %490 = vrot.lane.b32.xlu0 %v488, 32
    %v491 = vpop.permute.xlu0 %490
    %v493 = vsel %vm67, %v491, 0.0
    %494 = vadd.xlane.f32.xlu0 %v493
    %v495 = vpop.xlane.xlu0 %494
    %v496 = vmul.f32 %v495, 0.03125
    %v497 = vadd.f32 %v496, 1e-05
    %v498 = vrsqrt.pop %v497
    %v499 = vmul.f32 %v487, %v498
    %v500 = vmul.f32 %v499, %v207
    %v501 = vadd.f32 %v500, %v216
    %503 = vrot.lane.b32.xlu0 %v501, 32
    %v504 = vpop.permute.xlu0 %503
    %s506 = scalar_lea.vmem [#allocation9], 16
    %507 = vst.msk [vmem:[%s506] sm:$0xff] %vm67, %v504
    %s508 = scalar_lea.vmem [#allocation4], 24
    %v509 = vld [vmem:[%s508] sm:$0xff]
    %511 = vrot.lane.b32.xlu0 %v467, 32
    %v512 = vpop.permute.xlu0 %511
    %v513 = vsel %vm67, %v512, 0
    %515 = vmatprep.subr.mxu0 0.0
    %516 = vmatpush1.msra.mxu0 %v56
    %517 = vmatprep.subr.mxu0 0.0
    %518 = vmatpush1.msra.mxu0 %v57
    %519 = vmatprep.subr.mxu0 0.0
    %520 = vmatpush1.msra.mxu0 %v58
    %521 = vmatprep.subr.mxu0 0.0
    %522 = vmatpush1.msra.mxu0 %v59
    %523 = vmatprep.subr.mxu0 0.0
    %524 = vmatpush1.msra.mxu0 0.0
    %525 = vmatprep.subr.mxu0 0.0
    %526 = vmatpush1.msra.mxu0 0.0
    %527 = vmatprep.subr.mxu0 0.0
    %528 = vmatpush1.msra.mxu0 0.0
    %529 = vmatprep.subr.mxu0 0.0
    %530 = vmatpush1.msra.mxu0 0.0
    %531 = vmatprep.subr.mxu0 0.0
    %532 = vmatpush1.msra.mxu0 0.0
    %533 = vmatprep.subr.mxu0 0.0
    %534 = vmatpush1.msra.mxu0 0.0
    %535 = vmatprep.subr.mxu0 0.0
    %536 = vmatpush1.msra.mxu0 0.0
    %537 = vmatprep.subr.mxu0 0.0
    %538 = vmatpush1.msra.mxu0 0.0
    %539 = vmatprep.subr.mxu0 0.0
    %540 = vmatpush1.msra.mxu0 0.0
    %541 = vmatprep.subr.mxu0 0.0
    %542 = vmatpush1.msra.mxu0 0.0
    %543 = vmatprep.subr.mxu0 0.0
    %544 = vmatpush1.msra.mxu0 0.0
    %545 = vmatprep.subr.mxu0 0.0
    %546 = vmatpush1.msra.mxu0 0.0
    %547 = vmatprep.subr.mxu0 0.0
    %548 = vmatpush1.msra.mxu0 0.0
    %549 = vmatprep.subr.mxu0 0.0
    %550 = vmatpush1.msra.mxu0 0.0
    %551 = vmatprep.subr.mxu0 0.0
    %552 = vmatpush1.msra.mxu0 0.0
    %553 = vmatprep.subr.mxu0 0.0
    %554 = vmatpush1.msra.mxu0 0.0
    %555 = vmatprep.subr.mxu0 0.0
    %556 = vmatpush1.msra.mxu0 0.0
    %557 = vmatprep.subr.mxu0 0.0
    %558 = vmatpush1.msra.mxu0 0.0
    %559 = vmatprep.subr.mxu0 0.0
    %560 = vmatpush1.msra.mxu0 0.0
    %561 = vmatprep.subr.mxu0 0.0
    %562 = vmatpush1.msra.mxu0 0.0
    %563 = vmatprep.subr.mxu0 0.0
    %564 = vmatpush1.msra.mxu0 0.0
    %565 = vmatprep.subr.mxu0 0.0
    %566 = vmatpush1.msra.mxu0 0.0
    %567 = vmatprep.subr.mxu0 0.0
    %568 = vmatpush1.msra.mxu0 0.0
    %569 = vmatprep.subr.mxu0 0.0
    %570 = vmatpush1.msra.mxu0 0.0
    %571 = vmatprep.subr.mxu0 0.0
    %572 = vmatpush1.msra.mxu0 0.0
    %573 = vmatprep.subr.mxu0 0.0
    %574 = vmatpush1.msra.mxu0 0.0
    %575 = vmatprep.subr.mxu0 0.0
    %576 = vmatpush1.msra.mxu0 0.0
    %577 = vmatprep.subr.mxu0 0.0
    %578 = vmatpush1.msra.mxu0 0.0
    %579 = vmatprep.mubr.f32.mxu0 0.0
    %580 = vmatmul.mubr.f32.gmra.mrb[0].mxu0 %v513
    %v581 = vpop.f32.mrb[0].mxu0
    %v582 = vadd.f32 0.0, %v581
    %v583 = vpop.f32.mrb[0].mxu0
    %584 = vdwg.mxu0
    %v585 = vadd.f32 %v509, %v582
    %v586 = vxor.u32 %v585, 2147483648
    %v587 = vmul.f32 %v586, 1.442695
    %v588 = vpow.pop %v587
    %v589 = vadd.f32 %v588, 1.0
    %v590 = vrcp.pop %v589
    %v591 = vmul.f32 1.0, %v590
    %v592 = vtanh.pop %v585
    %v593 = vmul.f32 %v591, %v461
    %595 = vrot.lane.b32.xlu0 %v592, 64
    %v596 = vpop.permute.xlu0 %595
    %v598 = vmul.f32 %v591, %v596
    %600 = vrot.lane.b32.xlu0 %v598, 32
    %v601 = vpop.permute.xlu0 %600
    %v603 = vadd.f32 %v593, %v601
    %v604 = vtanh.pop %v603
    %606 = vrot.lane.b32.xlu0 %v604, 64
    %v607 = vpop.permute.xlu0 %606
    %v609 = vmul.f32 %v591, %v607
    %s610 = sadd.s32 %s63, 3
    %v611 = vstv %s610
    %vm612 = vcmp.lt.s32.totalorder %v611, %v62
    %v613 = vsel %vm612, 1, 0
    %v614 = vcvt.s32.f32 %v613
    %616 = vset.pattern.permute.xlu0 0
    %617 = vperm.xlu0 %616, %v614
    %v618 = vpop.permute.xlu0 %617
    %v620 = vmul.f32 %v609, %v618
    %622 = vrot.lane.b32.xlu0 %v620, 32
    %v623 = vpop.permute.xlu0 %622
    %v625 = vsel %vm67, %v623, 0.0
    %626 = vadd.xlane.f32.xlu0 %v625
    %v627 = vpop.xlane.xlu0 %626
    %v628 = vmul.f32 %v627, 0.03125
    %v629 = vsub.f32 %v620, %v628
    %v630 = vmul.f32 %v629, %v629
    %632 = vrot.lane.b32.xlu0 %v630, 32
    %v633 = vpop.permute.xlu0 %632
    %v635 = vsel %vm67, %v633, 0.0
    %636 = vadd.xlane.f32.xlu0 %v635
    %v637 = vpop.xlane.xlu0 %636
    %v638 = vmul.f32 %v637, 0.03125
    %v639 = vadd.f32 %v638, 1e-05
    %v640 = vrsqrt.pop %v639
    %v641 = vmul.f32 %v629, %v640
    %v642 = vmul.f32 %v641, %v207
    %v643 = vadd.f32 %v642, %v216
    %645 = vrot.lane.b32.xlu0 %v643, 32
    %v646 = vpop.permute.xlu0 %645
    %s648 = scalar_lea.vmem [#allocation9], 24
    %649 = vst.msk [vmem:[%s648] sm:$0xff] %vm67, %v646
    %s650 = scalar_lea.vmem [#allocation4], 32
    %v651 = vld [vmem:[%s650] sm:$0xff]
    %653 = vrot.lane.b32.xlu0 %v609, 32
    %v654 = vpop.permute.xlu0 %653
    %v655 = vsel %vm67, %v654, 0
    %657 = vmatprep.subr.mxu0 0.0
    %658 = vmatpush1.msra.mxu0 %v56
    %659 = vmatprep.subr.mxu0 0.0
    %660 = vmatpush1.msra.mxu0 %v57
    %661 = vmatprep.subr.mxu0 0.0
    %662 = vmatpush1.msra.mxu0 %v58
    %663 = vmatprep.subr.mxu0 0.0
    %664 = vmatpush1.msra.mxu0 %v59
    %665 = vmatprep.subr.mxu0 0.0
    %666 = vmatpush1.msra.mxu0 0.0
    %667 = vmatprep.subr.mxu0 0.0
    %668 = vmatpush1.msra.mxu0 0.0
    %669 = vmatprep.subr.mxu0 0.0
    %670 = vmatpush1.msra.mxu0 0.0
    %671 = vmatprep.subr.mxu0 0.0
    %672 = vmatpush1.msra.mxu0 0.0
    %673 = vmatprep.subr.mxu0 0.0
    %674 = vmatpush1.msra.mxu0 0.0
    %675 = vmatprep.subr.mxu0 0.0
    %676 = vmatpush1.msra.mxu0 0.0
    %677 = vmatprep.subr.mxu0 0.0
    %678 = vmatpush1.msra.mxu0 0.0
    %679 = vmatprep.subr.mxu0 0.0
    %680 = vmatpush1.msra.mxu0 0.0
    %681 = vmatprep.subr.mxu0 0.0
    %682 = vmatpush1.msra.mxu0 0.0
    %683 = vmatprep.subr.mxu0 0.0
    %684 = vmatpush1.msra.mxu0 0.0
    %685 = vmatprep.subr.mxu0 0.0
    %686 = vmatpush1.msra.mxu0 0.0
    %687 = vmatprep.subr.mxu0 0.0
    %688 = vmatpush1.msra.mxu0 0.0
    %689 = vmatprep.subr.mxu0 0.0
    %690 = vmatpush1.msra.mxu0 0.0
    %691 = vmatprep.subr.mxu0 0.0
    %692 = vmatpush1.msra.mxu0 0.0
    %693 = vmatprep.subr.mxu0 0.0
    %694 = vmatpush1.msra.mxu0 0.0
    %695 = vmatprep.subr.mxu0 0.0
    %696 = vmatpush1.msra.mxu0 0.0
    %697 = vmatprep.subr.mxu0 0.0
    %698 = vmatpush1.msra.mxu0 0.0
    %699 = vmatprep.subr.mxu0 0.0
    %700 = vmatpush1.msra.mxu0 0.0
    %701 = vmatprep.subr.mxu0 0.0
    %702 = vmatpush1.msra.mxu0 0.0
    %703 = vmatprep.subr.mxu0 0.0
    %704 = vmatpush1.msra.mxu0 0.0
    %705 = vmatprep.subr.mxu0 0.0
    %706 = vmatpush1.msra.mxu0 0.0
    %707 = vmatprep.subr.mxu0 0.0
    %708 = vmatpush1.msra.mxu0 0.0
    %709 = vmatprep.subr.mxu0 0.0
    %710 = vmatpush1.msra.mxu0 0.0
    %711 = vmatprep.subr.mxu0 0.0
    %712 = vmatpush1.msra.mxu0 0.0
    %713 = vmatprep.subr.mxu0 0.0
    %714 = vmatpush1.msra.mxu0 0.0
    %715 = vmatprep.subr.mxu0 0.0
    %716 = vmatpush1.msra.mxu0 0.0
    %717 = vmatprep.subr.mxu0 0.0
    %718 = vmatpush1.msra.mxu0 0.0
    %719 = vmatprep.subr.mxu0 0.0
    %720 = vmatpush1.msra.mxu0 0.0
    %721 = vmatprep.mubr.f32.mxu0 0.0
    %722 = vmatmul.mubr.f32.gmra.mrb[0].mxu0 %v655
    %v723 = vpop.f32.mrb[0].mxu0
    %v724 = vadd.f32 0.0, %v723
    %v725 = vpop.f32.mrb[0].mxu0
    %726 = vdwg.mxu0
    %v727 = vadd.f32 %v651, %v724
    %v728 = vxor.u32 %v727, 2147483648
    %v729 = vmul.f32 %v728, 1.442695
    %v730 = vpow.pop %v729
    %v731 = vadd.f32 %v730, 1.0
    %v732 = vrcp.pop %v731
    %v733 = vmul.f32 1.0, %v732
    %v734 = vtanh.pop %v727
    %v735 = vmul.f32 %v733, %v603
    %737 = vrot.lane.b32.xlu0 %v734, 64
    %v738 = vpop.permute.xlu0 %737
    %v740 = vmul.f32 %v733, %v738
    %742 = vrot.lane.b32.xlu0 %v740, 32
    %v743 = vpop.permute.xlu0 %742
    %v745 = vadd.f32 %v735, %v743
    %v746 = vtanh.pop %v745
    %748 = vrot.lane.b32.xlu0 %v746, 64
    %v749 = vpop.permute.xlu0 %748
    %v751 = vmul.f32 %v733, %v749
    %s752 = sadd.s32 %s63, 4
    %v753 = vstv %s752
    %vm754 = vcmp.lt.s32.totalorder %v753, %v62
    %v755 = vsel %vm754, 1, 0
    %v756 = vcvt.s32.f32 %v755
    %758 = vset.pattern.permute.xlu0 0
    %759 = vperm.xlu0 %758, %v756
    %v760 = vpop.permute.xlu0 %759
    %v762 = vmul.f32 %v751, %v760
    %764 = vrot.lane.b32.xlu0 %v762, 32
    %v765 = vpop.permute.xlu0 %764
    %v767 = vsel %vm67, %v765, 0.0
    %768 = vadd.xlane.f32.xlu0 %v767
    %v769 = vpop.xlane.xlu0 %768
    %v770 = vmul.f32 %v769, 0.03125
    %v771 = vsub.f32 %v762, %v770
    %v772 = vmul.f32 %v771, %v771
    %774 = vrot.lane.b32.xlu0 %v772, 32
    %v775 = vpop.permute.xlu0 %774
    %v777 = vsel %vm67, %v775, 0.0
    %778 = vadd.xlane.f32.xlu0 %v777
    %v779 = vpop.xlane.xlu0 %778
    %v780 = vmul.f32 %v779, 0.03125
    %v781 = vadd.f32 %v780, 1e-05
    %v782 = vrsqrt.pop %v781
    %v783 = vmul.f32 %v771, %v782
    %v784 = vmul.f32 %v783, %v207
    %v785 = vadd.f32 %v784, %v216
    %787 = vrot.lane.b32.xlu0 %v785, 32
    %v788 = vpop.permute.xlu0 %787
    %s790 = scalar_lea.vmem [#allocation9], 32
    %791 = vst.msk [vmem:[%s790] sm:$0xff] %vm67, %v788
    %s792 = scalar_lea.vmem [#allocation4], 40
    %v793 = vld [vmem:[%s792] sm:$0xff]
    %795 = vrot.lane.b32.xlu0 %v751, 32
    %v796 = vpop.permute.xlu0 %795
    %v797 = vsel %vm67, %v796, 0
    %799 = vmatprep.subr.mxu0 0.0
    %800 = vmatpush1.msra.mxu0 %v56
    %801 = vmatprep.subr.mxu0 0.0
    %802 = vmatpush1.msra.mxu0 %v57
    %803 = vmatprep.subr.mxu0 0.0
    %804 = vmatpush1.msra.mxu0 %v58
    %805 = vmatprep.subr.mxu0 0.0
    %806 = vmatpush1.msra.mxu0 %v59
    %807 = vmatprep.subr.mxu0 0.0
    %808 = vmatpush1.msra.mxu0 0.0
    %809 = vmatprep.subr.mxu0 0.0
    %810 = vmatpush1.msra.mxu0 0.0
    %811 = vmatprep.subr.mxu0 0.0
    %812 = vmatpush1.msra.mxu0 0.0
    %813 = vmatprep.subr.mxu0 0.0
    %814 = vmatpush1.msra.mxu0 0.0
    %815 = vmatprep.subr.mxu0 0.0
    %816 = vmatpush1.msra.mxu0 0.0
    %817 = vmatprep.subr.mxu0 0.0
    %818 = vmatpush1.msra.mxu0 0.0
    %819 = vmatprep.subr.mxu0 0.0
    %820 = vmatpush1.msra.mxu0 0.0
    %821 = vmatprep.subr.mxu0 0.0
    %822 = vmatpush1.msra.mxu0 0.0
    %823 = vmatprep.subr.mxu0 0.0
    %824 = vmatpush1.msra.mxu0 0.0
    %825 = vmatprep.subr.mxu0 0.0
    %826 = vmatpush1.msra.mxu0 0.0
    %827 = vmatprep.subr.mxu0 0.0
    %828 = vmatpush1.msra.mxu0 0.0
    %829 = vmatprep.subr.mxu0 0.0
    %830 = vmatpush1.msra.mxu0 0.0
    %831 = vmatprep.subr.mxu0 0.0
    %832 = vmatpush1.msra.mxu0 0.0
    %833 = vmatprep.subr.mxu0 0.0
    %834 = vmatpush1.msra.mxu0 0.0
    %835 = vmatprep.subr.mxu0 0.0
    %836 = vmatpush1.msra.mxu0 0.0
    %837 = vmatprep.subr.mxu0 0.0
    %838 = vmatpush1.msra.mxu0 0.0
    %839 = vmatprep.subr.mxu0 0.0
    %840 = vmatpush1.msra.mxu0 0.0
    %841 = vmatprep.subr.mxu0 0.0
    %842 = vmatpush1.msra.mxu0 0.0
    %843 = vmatprep.subr.mxu0 0.0
    %844 = vmatpush1.msra.mxu0 0.0
    %845 = vmatprep.subr.mxu0 0.0
    %846 = vmatpush1.msra.mxu0 0.0
    %847 = vmatprep.subr.mxu0 0.0
    %848 = vmatpush1.msra.mxu0 0.0
    %849 = vmatprep.subr.mxu0 0.0
    %850 = vmatpush1.msra.mxu0 0.0
    %851 = vmatprep.subr.mxu0 0.0
    %852 = vmatpush1.msra.mxu0 0.0
    %853 = vmatprep.subr.mxu0 0.0
    %854 = vmatpush1.msra.mxu0 0.0
    %855 = vmatprep.subr.mxu0 0.0
    %856 = vmatpush1.msra.mxu0 0.0
    %857 = vmatprep.subr.mxu0 0.0
    %858 = vmatpush1.msra.mxu0 0.0
    %859 = vmatprep.subr.mxu0 0.0
    %860 = vmatpush1.msra.mxu0 0.0
    %861 = vmatprep.subr.mxu0 0.0
    %862 = vmatpush1.msra.mxu0 0.0
    %863 = vmatprep.mubr.f32.mxu0 0.0
    %864 = vmatmul.mubr.f32.gmra.mrb[0].mxu0 %v797
    %v865 = vpop.f32.mrb[0].mxu0
    %v866 = vadd.f32 0.0, %v865
    %v867 = vpop.f32.mrb[0].mxu0
    %868 = vdwg.mxu0
    %v869 = vadd.f32 %v793, %v866
    %v870 = vxor.u32 %v869, 2147483648
    %v871 = vmul.f32 %v870, 1.442695
    %v872 = vpow.pop %v871
    %v873 = vadd.f32 %v872, 1.0
    %v874 = vrcp.pop %v873
    %v875 = vmul.f32 1.0, %v874
    %v876 = vtanh.pop %v869
    %v877 = vmul.f32 %v875, %v745
    %879 = vrot.lane.b32.xlu0 %v876, 64
    %v880 = vpop.permute.xlu0 %879
    %v882 = vmul.f32 %v875, %v880
    %884 = vrot.lane.b32.xlu0 %v882, 32
    %v885 = vpop.permute.xlu0 %884
    %v887 = vadd.f32 %v877, %v885
    %v888 = vtanh.pop %v887
    %890 = vrot.lane.b32.xlu0 %v888, 64
    %v891 = vpop.permute.xlu0 %890
    %v893 = vmul.f32 %v875, %v891
    %s894 = sadd.s32 %s63, 5
    %v895 = vstv %s894
    %vm896 = vcmp.lt.s32.totalorder %v895, %v62
    %v897 = vsel %vm896, 1, 0
    %v898 = vcvt.s32.f32 %v897
    %900 = vset.pattern.permute.xlu0 0
    %901 = vperm.xlu0 %900, %v898
    %v902 = vpop.permute.xlu0 %901
    %v904 = vmul.f32 %v893, %v902
    %906 = vrot.lane.b32.xlu0 %v904, 32
    %v907 = vpop.permute.xlu0 %906
    %v909 = vsel %vm67, %v907, 0.0
    %910 = vadd.xlane.f32.xlu0 %v909
    %v911 = vpop.xlane.xlu0 %910
    %v912 = vmul.f32 %v911, 0.03125
    %v913 = vsub.f32 %v904, %v912
    %v914 = vmul.f32 %v913, %v913
    %916 = vrot.lane.b32.xlu0 %v914, 32
    %v917 = vpop.permute.xlu0 %916
    %v919 = vsel %vm67, %v917, 0.0
    %920 = vadd.xlane.f32.xlu0 %v919
    %v921 = vpop.xlane.xlu0 %920
    %v922 = vmul.f32 %v921, 0.03125
    %v923 = vadd.f32 %v922, 1e-05
    %v924 = vrsqrt.pop %v923
    %v925 = vmul.f32 %v913, %v924
    %v926 = vmul.f32 %v925, %v207
    %v927 = vadd.f32 %v926, %v216
    %929 = vrot.lane.b32.xlu0 %v927, 32
    %v930 = vpop.permute.xlu0 %929
    %s932 = scalar_lea.vmem [#allocation9], 40
    %933 = vst.msk [vmem:[%s932] sm:$0xff] %vm67, %v930
    %s934 = scalar_lea.vmem [#allocation4], 48
    %v935 = vld [vmem:[%s934] sm:$0xff]
    %937 = vrot.lane.b32.xlu0 %v893, 32
    %v938 = vpop.permute.xlu0 %937
    %v939 = vsel %vm67, %v938, 0
    %941 = vmatprep.subr.mxu0 0.0
    %942 = vmatpush1.msra.mxu0 %v56
    %943 = vmatprep.subr.mxu0 0.0
    %944 = vmatpush1.msra.mxu0 %v57
    %945 = vmatprep.subr.mxu0 0.0
    %946 = vmatpush1.msra.mxu0 %v58
    %947 = vmatprep.subr.mxu0 0.0
    %948 = vmatpush1.msra.mxu0 %v59
    %949 = vmatprep.subr.mxu0 0.0
    %950 = vmatpush1.msra.mxu0 0.0
    %951 = vmatprep.subr.mxu0 0.0
    %952 = vmatpush1.msra.mxu0 0.0
    %953 = vmatprep.subr.mxu0 0.0
    %954 = vmatpush1.msra.mxu0 0.0
    %955 = vmatprep.subr.mxu0 0.0
    %956 = vmatpush1.msra.mxu0 0.0
    %957 = vmatprep.subr.mxu0 0.0
    %958 = vmatpush1.msra.mxu0 0.0
    %959 = vmatprep.subr.mxu0 0.0
    %960 = vmatpush1.msra.mxu0 0.0
    %961 = vmatprep.subr.mxu0 0.0
    %962 = vmatpush1.msra.mxu0 0.0
    %963 = vmatprep.subr.mxu0 0.0
    %964 = vmatpush1.msra.mxu0 0.0
    %965 = vmatprep.subr.mxu0 0.0
    %966 = vmatpush1.msra.mxu0 0.0
    %967 = vmatprep.subr.mxu0 0.0
    %968 = vmatpush1.msra.mxu0 0.0
    %969 = vmatprep.subr.mxu0 0.0
    %970 = vmatpush1.msra.mxu0 0.0
    %971 = vmatprep.subr.mxu0 0.0
    %972 = vmatpush1.msra.mxu0 0.0
    %973 = vmatprep.subr.mxu0 0.0
    %974 = vmatpush1.msra.mxu0 0.0
    %975 = vmatprep.subr.mxu0 0.0
    %976 = vmatpush1.msra.mxu0 0.0
    %977 = vmatprep.subr.mxu0 0.0
    %978 = vmatpush1.msra.mxu0 0.0
    %979 = vmatprep.subr.mxu0 0.0
    %980 = vmatpush1.msra.mxu0 0.0
    %981 = vmatprep.subr.mxu0 0.0
    %982 = vmatpush1.msra.mxu0 0.0
    %983 = vmatprep.subr.mxu0 0.0
    %984 = vmatpush1.msra.mxu0 0.0
    %985 = vmatprep.subr.mxu0 0.0
    %986 = vmatpush1.msra.mxu0 0.0
    %987 = vmatprep.subr.mxu0 0.0
    %988 = vmatpush1.msra.mxu0 0.0
    %989 = vmatprep.subr.mxu0 0.0
    %990 = vmatpush1.msra.mxu0 0.0
    %991 = vmatprep.subr.mxu0 0.0
    %992 = vmatpush1.msra.mxu0 0.0
    %993 = vmatprep.subr.mxu0 0.0
    %994 = vmatpush1.msra.mxu0 0.0
    %995 = vmatprep.subr.mxu0 0.0
    %996 = vmatpush1.msra.mxu0 0.0
    %997 = vmatprep.subr.mxu0 0.0
    %998 = vmatpush1.msra.mxu0 0.0
    %999 = vmatprep.subr.mxu0 0.0
    %1000 = vmatpush1.msra.mxu0 0.0
    %1001 = vmatprep.subr.mxu0 0.0
    %1002 = vmatpush1.msra.mxu0 0.0
    %1003 = vmatprep.subr.mxu0 0.0
    %1004 = vmatpush1.msra.mxu0 0.0
    %1005 = vmatprep.mubr.f32.mxu0 0.0
    %1006 = vmatmul.mubr.f32.gmra.mrb[0].mxu0 %v939
    %v1007 = vpop.f32.mrb[0].mxu0
    %v1008 = vadd.f32 0.0, %v1007
    %v1009 = vpop.f32.mrb[0].mxu0
    %1010 = vdwg.mxu0
    %v1011 = vadd.f32 %v935, %v1008
    %v1012 = vxor.u32 %v1011, 2147483648
    %v1013 = vmul.f32 %v1012, 1.442695
    %v1014 = vpow.pop %v1013
    %v1015 = vadd.f32 %v1014, 1.0
    %v1016 = vrcp.pop %v1015
    %v1017 = vmul.f32 1.0, %v1016
    %v1018 = vtanh.pop %v1011
    %v1019 = vmul.f32 %v1017, %v887
    %1021 = vrot.lane.b32.xlu0 %v1018, 64
    %v1022 = vpop.permute.xlu0 %1021
    %v1024 = vmul.f32 %v1017, %v1022
    %1026 = vrot.lane.b32.xlu0 %v1024, 32
    %v1027 = vpop.permute.xlu0 %1026
    %v1029 = vadd.f32 %v1019, %v1027
    %v1030 = vtanh.pop %v1029
    %1032 = vrot.lane.b32.xlu0 %v1030, 64
    %v1033 = vpop.permute.xlu0 %1032
    %v1035 = vmul.f32 %v1017, %v1033
    %s1036 = sadd.s32 %s63, 6
    %v1037 = vstv %s1036
    %vm1038 = vcmp.lt.s32.totalorder %v1037, %v62
    %v1039 = vsel %vm1038, 1, 0
    %v1040 = vcvt.s32.f32 %v1039
    %1042 = vset.pattern.permute.xlu0 0
    %1043 = vperm.xlu0 %1042, %v1040
    %v1044 = vpop.permute.xlu0 %1043
    %v1046 = vmul.f32 %v1035, %v1044
    %1048 = vrot.lane.b32.xlu0 %v1046, 32
    %v1049 = vpop.permute.xlu0 %1048
    %v1051 = vsel %vm67, %v1049, 0.0
    %1052 = vadd.xlane.f32.xlu0 %v1051
    %v1053 = vpop.xlane.xlu0 %1052
    %v1054 = vmul.f32 %v1053, 0.03125
    %v1055 = vsub.f32 %v1046, %v1054
    %v1056 = vmul.f32 %v1055, %v1055
    %1058 = vrot.lane.b32.xlu0 %v1056, 32
    %v1059 = vpop.permute.xlu0 %1058
    %v1061 = vsel %vm67, %v1059, 0.0
    %1062 = vadd.xlane.f32.xlu0 %v1061
    %v1063 = vpop.xlane.xlu0 %1062
    %v1064 = vmul.f32 %v1063, 0.03125
    %v1065 = vadd.f32 %v1064, 1e-05
    %v1066 = vrsqrt.pop %v1065
    %v1067 = vmul.f32 %v1055, %v1066
    %v1068 = vmul.f32 %v1067, %v207
    %v1069 = vadd.f32 %v1068, %v216
    %1071 = vrot.lane.b32.xlu0 %v1069, 32
    %v1072 = vpop.permute.xlu0 %1071
    %s1074 = scalar_lea.vmem [#allocation9], 48
    %1075 = vst.msk [vmem:[%s1074] sm:$0xff] %vm67, %v1072
    %s1076 = scalar_lea.vmem [#allocation4], 56
    %v1077 = vld [vmem:[%s1076] sm:$0xff]
    %1079 = vrot.lane.b32.xlu0 %v1035, 32
    %v1080 = vpop.permute.xlu0 %1079
    %v1081 = vsel %vm67, %v1080, 0
    %1083 = vmatprep.subr.mxu0 0.0
    %1084 = vmatpush1.msra.mxu0 %v56
    %1085 = vmatprep.subr.mxu0 0.0
    %1086 = vmatpush1.msra.mxu0 %v57
    %1087 = vmatprep.subr.mxu0 0.0
    %1088 = vmatpush1.msra.mxu0 %v58
    %1089 = vmatprep.subr.mxu0 0.0
    %1090 = vmatpush1.msra.mxu0 %v59
    %1091 = vmatprep.subr.mxu0 0.0
    %1092 = vmatpush1.msra.mxu0 0.0
    %1093 = vmatprep.subr.mxu0 0.0
    %1094 = vmatpush1.msra.mxu0 0.0
    %1095 = vmatprep.subr.mxu0 0.0
    %1096 = vmatpush1.msra.mxu0 0.0
    %1097 = vmatprep.subr.mxu0 0.0
    %1098 = vmatpush1.msra.mxu0 0.0
    %1099 = vmatprep.subr.mxu0 0.0
    %1100 = vmatpush1.msra.mxu0 0.0
    %1101 = vmatprep.subr.mxu0 0.0
    %1102 = vmatpush1.msra.mxu0 0.0
    %1103 = vmatprep.subr.mxu0 0.0
    %1104 = vmatpush1.msra.mxu0 0.0
    %1105 = vmatprep.subr.mxu0 0.0
    %1106 = vmatpush1.msra.mxu0 0.0
    %1107 = vmatprep.subr.mxu0 0.0
    %1108 = vmatpush1.msra.mxu0 0.0
    %1109 = vmatprep.subr.mxu0 0.0
    %1110 = vmatpush1.msra.mxu0 0.0
    %1111 = vmatprep.subr.mxu0 0.0
    %1112 = vmatpush1.msra.mxu0 0.0
    %1113 = vmatprep.subr.mxu0 0.0
    %1114 = vmatpush1.msra.mxu0 0.0
    %1115 = vmatprep.subr.mxu0 0.0
    %1116 = vmatpush1.msra.mxu0 0.0
    %1117 = vmatprep.subr.mxu0 0.0
    %1118 = vmatpush1.msra.mxu0 0.0
    %1119 = vmatprep.subr.mxu0 0.0
    %1120 = vmatpush1.msra.mxu0 0.0
    %1121 = vmatprep.subr.mxu0 0.0
    %1122 = vmatpush1.msra.mxu0 0.0
    %1123 = vmatprep.subr.mxu0 0.0
    %1124 = vmatpush1.msra.mxu0 0.0
    %1125 = vmatprep.subr.mxu0 0.0
    %1126 = vmatpush1.msra.mxu0 0.0
    %1127 = vmatprep.subr.mxu0 0.0
    %1128 = vmatpush1.msra.mxu0 0.0
    %1129 = vmatprep.subr.mxu0 0.0
    %1130 = vmatpush1.msra.mxu0 0.0
    %1131 = vmatprep.subr.mxu0 0.0
    %1132 = vmatpush1.msra.mxu0 0.0
    %1133 = vmatprep.subr.mxu0 0.0
    %1134 = vmatpush1.msra.mxu0 0.0
    %1135 = vmatprep.subr.mxu0 0.0
    %1136 = vmatpush1.msra.mxu0 0.0
    %1137 = vmatprep.subr.mxu0 0.0
    %1138 = vmatpush1.msra.mxu0 0.0
    %1139 = vmatprep.subr.mxu0 0.0
    %1140 = vmatpush1.msra.mxu0 0.0
    %1141 = vmatprep.subr.mxu0 0.0
    %1142 = vmatpush1.msra.mxu0 0.0
    %1143 = vmatprep.subr.mxu0 0.0
    %1144 = vmatpush1.msra.mxu0 0.0
    %1145 = vmatprep.subr.mxu0 0.0
    %1146 = vmatpush1.msra.mxu0 0.0
    %1147 = vmatprep.mubr.f32.mxu0 0.0
    %1148 = vmatmul.mubr.f32.gmra.mrb[0].mxu0 %v1081
    %v1149 = vpop.f32.mrb[0].mxu0
    %v1150 = vadd.f32 0.0, %v1149
    %v1151 = vpop.f32.mrb[0].mxu0
    %1152 = vdwg.mxu0
    %v1153 = vadd.f32 %v1077, %v1150
    %v1154 = vxor.u32 %v1153, 2147483648
    %v1155 = vmul.f32 %v1154, 1.442695
    %v1156 = vpow.pop %v1155
    %v1157 = vadd.f32 %v1156, 1.0
    %v1158 = vrcp.pop %v1157
    %v1159 = vmul.f32 1.0, %v1158
    %v1160 = vtanh.pop %v1153
    %v1161 = vmul.f32 %v1159, %v1029
    %1163 = vrot.lane.b32.xlu0 %v1160, 64
    %v1164 = vpop.permute.xlu0 %1163
    %v1166 = vmul.f32 %v1159, %v1164
    %1168 = vrot.lane.b32.xlu0 %v1166, 32
    %v1169 = vpop.permute.xlu0 %1168
    %v1171 = vadd.f32 %v1161, %v1169
    %v1172 = vtanh.pop %v1171
    %1174 = vrot.lane.b32.xlu0 %v1172, 64
    %v1175 = vpop.permute.xlu0 %1174
    %v1177 = vmul.f32 %v1159, %v1175
    %s1178 = sadd.s32 %s63, 7
    %v1179 = vstv %s1178
    %vm1180 = vcmp.lt.s32.totalorder %v1179, %v62
    %v1181 = vsel %vm1180, 1, 0
    %v1182 = vcvt.s32.f32 %v1181
    %1184 = vset.pattern.permute.xlu0 0
    %1185 = vperm.xlu0 %1184, %v1182
    %v1186 = vpop.permute.xlu0 %1185
    %v1188 = vmul.f32 %v1177, %v1186
    %1190 = vrot.lane.b32.xlu0 %v1188, 32
    %v1191 = vpop.permute.xlu0 %1190
    %v1193 = vsel %vm67, %v1191, 0.0
    %1194 = vadd.xlane.f32.xlu0 %v1193
    %v1195 = vpop.xlane.xlu0 %1194
    %v1196 = vmul.f32 %v1195, 0.03125
    %v1197 = vsub.f32 %v1188, %v1196
    %v1198 = vmul.f32 %v1197, %v1197
    %1200 = vrot.lane.b32.xlu0 %v1198, 32
    %v1201 = vpop.permute.xlu0 %1200
    %v1203 = vsel %vm67, %v1201, 0.0
    %1204 = vadd.xlane.f32.xlu0 %v1203
    %v1205 = vpop.xlane.xlu0 %1204
    %v1206 = vmul.f32 %v1205, 0.03125
    %v1207 = vadd.f32 %v1206, 1e-05
    %v1208 = vrsqrt.pop %v1207
    %v1209 = vmul.f32 %v1197, %v1208
    %v1210 = vmul.f32 %v1209, %v207
    %v1211 = vadd.f32 %v1210, %v216
    %1213 = vrot.lane.b32.xlu0 %v1211, 32
    %v1214 = vpop.permute.xlu0 %1213
    %s1216 = scalar_lea.vmem [#allocation9], 56
    %1217 = vst.msk [vmem:[%s1216] sm:$0xff] %vm67, %v1214
    %1219 = vrot.lane.b32.xlu0 %v1177, 32
    %v1220 = vpop.permute.xlu0 %1219
    %1222 = vst.msk [vmem:[#allocation2] sm:$0xff] %vm67, %v1220
    %1224 = vrot.lane.b32.xlu0 %v1171, 96
    %v1225 = vpop.permute.xlu0 %1224
    %1227 = vst.msk [vmem:[#allocation3] sm:$0xff] %vm67, %v1225
    // Predicated region
    $region34: #{tpu_custom_call.1} parent=1 // pred_check
      _
    $region35: #{tpu_custom_call.1} parent=1 // pred_check_branch
      %1229 = sbr.rel (0) target = $region37
    $region36: #{tpu_custom_call.1} parent=1 // pred_region
      %s1231 = ssub.s32 1024, 1024
      %1232 = vsyncadd [#allocation6], %s1231
      %s1233 = sshll.u32 [#allocation9], 4
      %s1234 = int_to_ptr.vmem [resolvable:$true] %s1233
      %1239 = dma.vmem_to_hbm [thread:$0]  %s1234, 1024, %s5, [#allocation6], 128, 128, 8
    $region37: #{tpu_custom_call.1} parent=1 // pred_fallthru
      _
    // Predicated region
    $region38: #{tpu_custom_call.1} parent=1 // pred_check
      _
    $region39: #{tpu_custom_call.1} parent=1 // pred_check_branch
      %1241 = sbr.rel (0) target = $region41
    $region40: #{tpu_custom_call.1} parent=1 // pred_region
      %1242 = dma.done [#allocation6], 1024
    $region41: #{tpu_custom_call.1} parent=1 // pred_fallthru
      _
    %1243 = vsyncpa [#allocation5], 1
    %1244 = vsyncpa [#allocation8], 1
    %1245 = vsyncpa [#allocation6], 1

</llo_original>
